<compile_context>
chip_gen: v6e
topology: v6e:2x2x1
jax: 0.10.0
libtpu: 0.0.40
codegen_flags: <defaults>
</compile_context>

<pallas_src>
import functools

import jax
import jax.numpy as jnp
from jax import lax
from jax.experimental import pallas as pl
from jax.experimental.pallas import tpu as pltpu


def _self_attn_kernel(x_ref, wqkv_ref, bqkv_ref, gamma_ref, out_ref, attn_ref,
                      qkv_ref, *, C, N, TQ, hoist):
    """One (batch b, query-tile q) grid step.

    x_ref:    (1, C, N)   input slab for batch b (constant block along q)
    wqkv_ref: (3C, C)     fused [Wq; Wk; Wv] 1x1-conv weights
    bqkv_ref: (3C, 1)     fused biases
    gamma_ref:(1,)        SMEM scalar
    out_ref:  (1, C, TQ)  residual-output columns for this query tile
    attn_ref: (1, TQ, N)  attention rows for this query tile (f32)
    qkv_ref:  (3C, N)     bf16 VMEM scratch holding the per-batch projection
    """
    q_idx = pl.program_id(1)
    col = pl.multiple_of(q_idx * TQ, TQ)

    def project():
        # 1x1 convolutions == one fused channel-mixing matmul on the MXU.
        qkv = jnp.dot(wqkv_ref[...], x_ref[0],
                      preferred_element_type=jnp.float32) + bqkv_ref[...]
        qkv_ref[...] = qkv.astype(qkv_ref.dtype)          # bf16: feeds the MXU

    if hoist:
        # Once per batch; scratch carries across the (sequential) query tiles.
        pl.when(q_idx == 0)(project)
    else:
        # B == 1 megacore path: query tiles are sharded across TensorCores, so
        # each tile re-projects (a cheap (3C,C)@(C,N) vs. the O(C*N*N) work).
        project()

    q = qkv_ref[pl.ds(0 * C, C), pl.ds(col, TQ)]           # (C, TQ) bf16
    k = qkv_ref[pl.ds(1 * C, C), :]                        # (C, N)  bf16
    v = qkv_ref[pl.ds(2 * C, C), :]                        # (C, N)  bf16

    # energy[i, j] = sum_c Q[c, i] K[c, j]  -> (TQ, N), f32 accumulation.
    # Contraction is over the small channel dim; any lowering-inserted
    # transpose lands on the (C, TQ) operand, never on a (TQ, N) tile.
    energy = lax.dot_general(q, k, (((0,), (0,)), ((), ())),
                             preferred_element_type=jnp.float32)

    # Numerically stable softmax over keys, kept f32 on every generation
    # (v6e/v7x could run the exp in bf16 if the EUP slot ever binds).
    m = jnp.max(energy, axis=-1, keepdims=True)
    e = jnp.exp(energy - m)
    attn = e / jnp.sum(e, axis=-1, keepdims=True)          # exact divide (parity)
    attn_ref[0] = attn                                     # f32 output (parity)

    # out[c, i] = sum_j V[c, j] attn[i, j]  -> (C, TQ): contract the shared
    # last (key) dim -- the MXU-native "bqd,bkd->bqk" form, no attn transpose.
    out = lax.dot_general(v, attn.astype(jnp.bfloat16),
                          (((1,), (1,)), ((), ())),
                          preferred_element_type=jnp.float32)

    # residual: gamma * out + x   (gamma is a scalar read from SMEM)
    out_ref[0] = gamma_ref[0] * out + x_ref[0, :, pl.ds(col, TQ)]


def _vmem_capacity_bytes():
    try:
        return int(pltpu.get_tpu_info().vmem_capacity_bytes)
    except Exception:
        return 64 * 1024 * 1024   # conservative fallback: v7x per-TC VMEM


def _choose_tq(C, N, vmem_cap):
    """Largest lane-aligned query tile whose live footprint fits in VMEM."""
    if N <= 1024:
        return N                  # one grid step per batch: no pipeline overhead
    budget = int(vmem_cap * 0.7)  # headroom for compiler temps / semaphores
    fixed = (2 * C * N * 4              # x slab (double-buffered, f32)
             + 3 * C * N * 2            # bf16 QKV scratch
             + 3 * C * N * 4            # f32 projection temporary (once/batch)
             + 2 * (3 * C * C + 3 * C) * 4)   # weights + biases (double-buffered)
    for tq in (1024, 512, 256, 128):
        if N % tq:
            continue
        live = (fixed
                + 2 * tq * N * 4        # attention output block (double-buffered)
                + 3 * tq * N * 4        # energy / e / attn f32 temporaries
                + 2 * C * tq * 4)       # out block (double-buffered)
        if live <= budget:
            return tq
    if N % 128 == 0:
        return 128
    # TODO(synk): tile the key axis as well for very large N not divisible by 128.
    return N


def self_attn(x, wq, bq, wk, bk, wv, bv, gamma):
    """x: (B, C, W, H) float32. Returns (out: (B, C, W, H), attention: (B, N, N))."""
    B, C, W, H = x.shape
    N = W * H
    x_flat = x.reshape(B, C, N)

    # Fuse the three 1x1-conv weight/bias sets into one projection.
    wqkv = jnp.concatenate(
        [wq.reshape(C, C), wk.reshape(C, C), wv.reshape(C, C)], axis=0)   # (3C, C)
    bqkv = jnp.concatenate([bq, bk, bv]).reshape(3 * C, 1)                # (3C, 1)
    gamma1 = gamma.reshape(1)

    vmem_cap = _vmem_capacity_bytes()
    TQ = _choose_tq(C, N, vmem_cap)
    n_q = N // TQ

    # For B == 1 with many query tiles, keep both axes "parallel" so v7x's two
    # TensorCores shard the query tiles; the projection is then re-done per
    # tile (cheap) instead of carried in scratch.
    hoist = not (B == 1 and n_q > 1)
    dim_sem = (("parallel", "arbitrary") if (hoist and n_q > 1)
               else ("parallel", "parallel"))

    kernel = functools.partial(_self_attn_kernel, C=C, N=N, TQ=TQ, hoist=hoist)

    cost = pl.CostEstimate(
        flops=int(B * (6 * C * C * N + 4 * C * N * N)),
        transcendentals=int(B * N * N),
        bytes_accessed=int(4 * (2 * B * C * N + B * N * N)
                           + 4 * (3 * C * C + 3 * C)),
    )

    out_flat, attn = pl.pallas_call(
        kernel,
        out_shape=(
            jax.ShapeDtypeStruct((B, C, N), jnp.float32),
            jax.ShapeDtypeStruct((B, N, N), jnp.float32),
        ),
        grid_spec=pltpu.PrefetchScalarGridSpec(
            num_scalar_prefetch=0,
            grid=(B, n_q),
            in_specs=[
                pl.BlockSpec((1, C, N), lambda b, q: (b, 0, 0)),      # x slab
                pl.BlockSpec((3 * C, C), lambda b, q: (0, 0)),        # [Wq;Wk;Wv]
                pl.BlockSpec((3 * C, 1), lambda b, q: (0, 0)),        # [bq;bk;bv]
                pl.BlockSpec(memory_space=pltpu.MemorySpace.SMEM),    # gamma
            ],
            out_specs=(
                pl.BlockSpec((1, C, TQ), lambda b, q: (b, 0, q)),     # out columns
                pl.BlockSpec((1, TQ, N), lambda b, q: (b, q, 0)),     # attn rows
            ),
            scratch_shapes=[pltpu.VMEM((3 * C, N), jnp.bfloat16)],    # QKV carry
        ),
        compiler_params=pltpu.CompilerParams(
            dimension_semantics=dim_sem,
            vmem_limit_bytes=int(vmem_cap * 0.9),
        ),
        cost_estimate=cost,
    )(x_flat, wqkv, bqkv, gamma1)

    return out_flat.reshape(B, C, W, H), attn


def _self_attn_reference(x, wq, bq, wk, bk, wv, bv, gamma):
    """Pure-JAX f32 reference matching the PyTorch module."""
    B, C, W, H = x.shape
    N = W * H
    xf = x.reshape(B, C, N)
    q = jnp.einsum('oc,bcn->bon', wq.reshape(C, C), xf) + bq.reshape(1, C, 1)
    k = jnp.einsum('oc,bcn->bon', wk.reshape(C, C), xf) + bk.reshape(1, C, 1)
    v = jnp.einsum('oc,bcn->bon', wv.reshape(C, C), xf) + bv.reshape(1, C, 1)
    energy = jnp.einsum('bci,bcj->bij', q, k)
    attn = jax.nn.softmax(energy, axis=-1)
    out = jnp.einsum('bcj,bij->bci', v, attn)
    out = gamma.reshape(()) * out + xf
    return out.reshape(B, C, W, H), attn


if __name__ == "__main__":
    # Small shapes consistent with the module: x is (batch, n_head, W, H).
    B, C, W, H = 2, 4, 16, 16
    key = jax.random.PRNGKey(0)
    ks = jax.random.split(key, 7)

    x = jax.random.normal(ks[0], (B, C, W, H), dtype=jnp.float32)

    # Conv2d(in_dim, in_dim, kernel_size=1) weights: (C, C, 1, 1), biases: (C,)
    scale = 1.0 / jnp.sqrt(jnp.float32(C))
    wq = jax.random.uniform(ks[1], (C, C, 1, 1), minval=-scale, maxval=scale, dtype=jnp.float32)
    bq = jax.random.uniform(ks[2], (C,), minval=-scale, maxval=scale, dtype=jnp.float32)
    wk = jax.random.uniform(ks[3], (C, C, 1, 1), minval=-scale, maxval=scale, dtype=jnp.float32)
    bk = jax.random.uniform(ks[4], (C,), minval=-scale, maxval=scale, dtype=jnp.float32)
    wv = jax.random.uniform(ks[5], (C, C, 1, 1), minval=-scale, maxval=scale, dtype=jnp.float32)
    bv = jax.random.uniform(ks[6], (C,), minval=-scale, maxval=scale, dtype=jnp.float32)

    N = W * H

    # 1) gamma == 0 (the module's init): out must equal x exactly; softmax rows
    #    sum to 1 (exact divide in the kernel -> tight tolerance).
    gamma0 = jnp.zeros((1,), dtype=jnp.float32)
    out0, attn0 = self_attn(x, wq, bq, wk, bk, wv, bv, gamma0)
    out0 = jax.block_until_ready(out0)
    attn0 = jax.block_until_ready(attn0)
    assert out0.shape == (B, C, W, H)
    assert attn0.shape == (B, N, N)
    row_sums = jnp.sum(attn0, axis=-1)
    assert bool(jnp.all(jnp.abs(row_sums - 1.0) < 1e-4))
    assert bool(jnp.all(out0 == x))

    # 2) gamma != 0: full residual path vs. the pure-JAX f32 reference.
    #    Loose tolerance because the kernel feeds bf16 operands to the MXU.
    gamma_nz = jnp.full((1,), 0.7, dtype=jnp.float32)
    out1, attn1 = self_attn(x, wq, bq, wk, bk, wv, bv, gamma_nz)
    out1 = jax.block_until_ready(out1)
    attn1 = jax.block_until_ready(attn1)
    ref_out, ref_attn = _self_attn_reference(x, wq, bq, wk, bk, wv, bv, gamma_nz)
    assert float(jnp.max(jnp.abs(attn1 - ref_attn))) < 1e-2
    assert float(jnp.max(jnp.abs(out1 - ref_out))) < 5e-2

    print("KERNEL_OK")
</pallas_src>

<mosaic_0001>
module attributes {stable_mosaic.version = 11 : i64} {
  func.func @_self_attn_kernel(%arg0: i32, %arg1: i32, %arg2: memref<1x4x256xf32, #tpu.memory_space<vmem>>, %arg3: memref<12x4xf32, #tpu.memory_space<vmem>>, %arg4: memref<12x1xf32, #tpu.memory_space<vmem>>, %arg5: memref<1xf32, #tpu.memory_space<smem>>, %arg6: memref<1x4x256xf32, #tpu.memory_space<vmem>>, %arg7: memref<1x256x256xf32, #tpu.memory_space<vmem>>, %arg8: memref<12x256xbf16, #tpu.memory_space<vmem>>) attributes {dimension_semantics = [#tpu.dimension_semantics<parallel>, #tpu.dimension_semantics<parallel>], iteration_bounds = array<i64: 2, 1>, scalar_prefetch = 0 : i64, scratch_operands = 1 : i64, tpu.core_type = #tpu.core_type<tc>, window_params = [{transform_indices = @transform_0, window_bounds = array<i64: 1, 4, 256>}, {pipeline_mode = #tpu.pipeline_mode<synchronous>, transform_indices = @transform_1, window_bounds = array<i64: 12, 4>}, {pipeline_mode = #tpu.pipeline_mode<synchronous>, transform_indices = @transform_2, window_bounds = array<i64: 12, 1>}, {transform_indices = @transform_3, window_bounds = array<i64: 1>}, {transform_indices = @transform_4, window_bounds = array<i64: 1, 4, 256>}, {transform_indices = @transform_5, window_bounds = array<i64: 1, 256, 256>}]} {
    %c256_i32 = arith.constant 256 : i32
    %0 = arith.muli %arg1, %c256_i32 : i32
    %1 = tpu.assume_multiple %0, 256 : i32
    %c0_i32 = arith.constant 0 : i32
    %2 = arith.cmpi eq, %arg1, %c0_i32 : i32
    %3 = arith.extui %2 : i1 to i32
    %c0_i32_0 = arith.constant 0 : i32
    %4 = arith.cmpi ne, %3, %c0_i32_0 : i32
    scf.if %4 {
      %c0_15 = arith.constant 0 : index
      %c0_16 = arith.constant 0 : index
      %34 = vector.load %arg3[%c0_15, %c0_16] : memref<12x4xf32, #tpu.memory_space<vmem>>, vector<12x4xf32>
      %c0_17 = arith.constant 0 : index
      %c0_18 = arith.constant 0 : index
      %c0_19 = arith.constant 0 : index
      %35 = vector.load %arg2[%c0_17, %c0_18, %c0_19] : memref<1x4x256xf32, #tpu.memory_space<vmem>>, vector<1x4x256xf32>
      %36 = vector.shape_cast %35 : vector<1x4x256xf32> to vector<4x256xf32>
      %cst_20 = arith.constant dense<0.000000e+00> : vector<12x256xf32>
      %37 = tpu.matmul %34, %36, %cst_20 {dimension_numbers = #tpu.dot_dimension_numbers<[1], [0], [0], [1], [0, 0, 1, 1], [], []>} : vector<12x4xf32>, vector<4x256xf32>, vector<12x256xf32> -> vector<12x256xf32>
      %c0_21 = arith.constant 0 : index
      %c0_22 = arith.constant 0 : index
      %38 = vector.load %arg4[%c0_21, %c0_22] : memref<12x1xf32, #tpu.memory_space<vmem>>, vector<12x1xf32>
      %39 = vector.broadcast %38 : vector<12x1xf32> to vector<12x256xf32>
      %40 = arith.addf %37, %39 : vector<12x256xf32>
      %41 = arith.truncf %40 : vector<12x256xf32> to vector<12x256xbf16>
      %c0_23 = arith.constant 0 : index
      %c0_24 = arith.constant 0 : index
      %42 = vector.load %arg8[%c0_23, %c0_24] : memref<12x256xbf16, #tpu.memory_space<vmem>>, vector<12x256xbf16>
      tpu.vector_store %arg8[%c0_23, %c0_24], %41 {strides = array<i32>} : memref<12x256xbf16, #tpu.memory_space<vmem>>, vector<12x256xbf16>,
    } else {
    }
    %c0 = arith.constant 0 : index
    %5 = arith.index_cast %1 : i32 to index
    %6 = vector.load %arg8[%c0, %5] : memref<12x256xbf16, #tpu.memory_space<vmem>>, vector<4x256xbf16>
    %c4 = arith.constant 4 : index
    %c0_1 = arith.constant 0 : index
    %7 = vector.load %arg8[%c4, %c0_1] : memref<12x256xbf16, #tpu.memory_space<vmem>>, vector<4x256xbf16>
    %c8 = arith.constant 8 : index
    %c0_2 = arith.constant 0 : index
    %8 = vector.load %arg8[%c8, %c0_2] : memref<12x256xbf16, #tpu.memory_space<vmem>>, vector<4x256xbf16>
    %cst = arith.constant dense<0.000000e+00> : vector<256x256xf32>
    %9 = tpu.matmul %6, %7, %cst {dimension_numbers = #tpu.dot_dimension_numbers<[0], [0], [1], [1], [0, 1, 1, 1], [], []>} : vector<4x256xbf16>, vector<4x256xbf16>, vector<256x256xf32> -> vector<256x256xf32>
    %cst_3 = arith.constant dense<0xFF800000> : vector<256xf32>
    %10 = vector.multi_reduction <maximumf>, %9, %cst_3 [1] : vector<256x256xf32> to vector<256xf32>
    %11 = vector.shape_cast %10 : vector<256xf32> to vector<256x1xf32>
    %12 = vector.broadcast %11 : vector<256x1xf32> to vector<256x256xf32>
    %13 = arith.subf %9, %12 : vector<256x256xf32>
    %14 = math.exp %13 : vector<256x256xf32>
    %cst_4 = arith.constant dense<0.000000e+00> : vector<256xf32>
    %15 = vector.multi_reduction <add>, %14, %cst_4 [1] : vector<256x256xf32> to vector<256xf32>
    %16 = vector.shape_cast %15 : vector<256xf32> to vector<256x1xf32>
    %17 = vector.broadcast %16 : vector<256x1xf32> to vector<256x256xf32>
    %18 = arith.divf %14, %17 : vector<256x256xf32>
    %c0_5 = arith.constant 0 : index
    %c0_6 = arith.constant 0 : index
    %c0_7 = arith.constant 0 : index
    %19 = vector.load %arg7[%c0_5, %c0_6, %c0_7] : memref<1x256x256xf32, #tpu.memory_space<vmem>>, vector<1x256x256xf32>
    %20 = vector.shape_cast %19 : vector<1x256x256xf32> to vector<256x256xf32>
    %21 = vector.shape_cast %18 : vector<256x256xf32> to vector<1x256x256xf32>
    tpu.vector_store %arg7[%c0_5, %c0_6, %c0_7], %21 {strides = array<i32>} : memref<1x256x256xf32, #tpu.memory_space<vmem>>, vector<1x256x256xf32>,
    %22 = arith.truncf %18 : vector<256x256xf32> to vector<256x256xbf16>
    %cst_8 = arith.constant dense<0.000000e+00> : vector<4x256xf32>
    %23 = tpu.matmul %8, %22, %cst_8 {dimension_numbers = #tpu.dot_dimension_numbers<[1], [1], [0], [0], [0, 0, 1, 0], [], []>} : vector<4x256xbf16>, vector<256x256xbf16>, vector<4x256xf32> -> vector<4x256xf32>
    %c0_9 = arith.constant 0 : index
    %24 = memref.load %arg5[%c0_9] : memref<1xf32, #tpu.memory_space<smem>>
    %25 = vector.broadcast %24 : f32 to vector<4x256xf32>
    %26 = arith.mulf %25, %23 : vector<4x256xf32>
    %c0_10 = arith.constant 0 : index
    %c0_11 = arith.constant 0 : index
    %27 = arith.index_cast %1 : i32 to index
    %28 = vector.load %arg2[%c0_10, %c0_11, %27] : memref<1x4x256xf32, #tpu.memory_space<vmem>>, vector<1x4x256xf32>
    %29 = vector.shape_cast %28 : vector<1x4x256xf32> to vector<4x256xf32>
    %30 = arith.addf %26, %29 : vector<4x256xf32>
    %c0_12 = arith.constant 0 : index
    %c0_13 = arith.constant 0 : index
    %c0_14 = arith.constant 0 : index
    %31 = vector.load %arg6[%c0_12, %c0_13, %c0_14] : memref<1x4x256xf32, #tpu.memory_space<vmem>>, vector<1x4x256xf32>
    %32 = vector.shape_cast %31 : vector<1x4x256xf32> to vector<4x256xf32>
    %33 = vector.shape_cast %30 : vector<4x256xf32> to vector<1x4x256xf32>
    tpu.vector_store %arg6[%c0_12, %c0_13, %c0_14], %33 {strides = array<i32>} : memref<1x4x256xf32, #tpu.memory_space<vmem>>, vector<1x4x256xf32>,
    return
  }
  func.func @transform_0(%arg0: i32, %arg1: i32) -> (i32, i32, i32) {
    %c0_i32 = arith.constant 0 : i32
    %c0_i32_0 = arith.constant 0 : i32
    %c0_i32_1 = arith.constant 0 : i32
    return %arg0, %c0_i32, %c0_i32_0 : i32, i32, i32
  }
  func.func @transform_1(%arg0: i32, %arg1: i32) -> (i32, i32) {
    %c0_i32 = arith.constant 0 : i32
    %c0_i32_0 = arith.constant 0 : i32
    %c0_i32_1 = arith.constant 0 : i32
    return %c0_i32, %c0_i32_0 : i32, i32
  }
  func.func @transform_2(%arg0: i32, %arg1: i32) -> (i32, i32) {
    %c0_i32 = arith.constant 0 : i32
    %c0_i32_0 = arith.constant 0 : i32
    %c0_i32_1 = arith.constant 0 : i32
    return %c0_i32, %c0_i32_0 : i32, i32
  }
  func.func @transform_3(%arg0: i32, %arg1: i32) -> i32 {
    %c0_i32 = arith.constant 0 : i32
    %c0_i32_0 = arith.constant 0 : i32
    return %c0_i32 : i32
  }
  func.func @transform_4(%arg0: i32, %arg1: i32) -> (i32, i32, i32) {
    %c0_i32 = arith.constant 0 : i32
    %c0_i32_0 = arith.constant 0 : i32
    return %arg0, %c0_i32, %arg1 : i32, i32, i32
  }
  func.func @transform_5(%arg0: i32, %arg1: i32) -> (i32, i32, i32) {
    %c0_i32 = arith.constant 0 : i32
    %c0_i32_0 = arith.constant 0 : i32
    return %arg0, %arg1, %c0_i32 : i32, i32, i32
  }
}

</mosaic_0001>

<llo_original>
// kernel: tpu_custom_call.1
$region0: #{tpu_custom_call.1}
  #allocation0 [shape = 'u32[]', space=smem, size = 0x4, offset = 0x4, fixed_abs, tag = 'smem constant byte address 0x4 - core index']
  #allocation1 [shape = 'u32[144,128]{1,0:T(1,128)}', space=vmem, size = 0x12000, scoped, tag = 'internal scratch']
  #allocation2 [shape = 'bf16[12,256]{1,0:T(8,128)(2,1)}', space=vmem, size = 0x2000, scoped, tag = 'scratch operand']
  #allocation3 [shape = 'f32[1]{0:T(128)S(6)}', space=smem, size = 0x200, scoped, tag = 'scoped memory for tpu_custom_call.1']
  %s0 = inlined_call_operand.vmem [shape: f32[2,4,256], index: 0, kind: input, shape index: {}]
  %s1 = inlined_call_operand.vmem [shape: f32[12,4], index: 1, kind: input, shape index: {}]
  %s2 = inlined_call_operand.vmem [shape: f32[12,1], index: 2, kind: input, shape index: {}]
  %s3 = inlined_call_operand.<no memory space> [shape: f32[1], index: 3, kind: input, shape index: {}]
  %s4 = inlined_call_operand.hbm [shape: f32[2,4,256], index: 4, kind: output, shape index: {0}]
  %s5 = inlined_call_operand.hbm [shape: f32[2,256,256], index: 5, kind: output, shape index: {1}]
  %6 = xla_tuple %s4, %s5
  %s7 = sld [smem:[#allocation0]]
  $region61: #{tpu_custom_call.1} parent=0
    _
  %s9 = ssub.s32 1, %s7
  %s10 = scalar_select 0, %s9, %s7
  %11 = sst [smem:[#allocation3]] %s3
  $region1: #{tpu_custom_call.1} parent=0
    #allocation4 [shape = 'u8[8192]{0}', space=vmem, size = 0x2000, scoped, tag = 'output window, operand 0']
    #allocation5 [shape = 's32[2]{0}', space=sflag, size = 0x8, scoped, tag = 'scoped memory for tpu_custom_call.1']
    #allocation6 [shape = 'u8[524288]{0}', space=vmem, size = 0x80000, scoped, tag = 'output window, operand 1']
    #allocation7 [shape = 's32[2]{0}', space=sflag, size = 0x8, scoped, tag = 'scoped memory for tpu_custom_call.1']
    %12 = vsyncpa [#allocation5], 0
    %s13 = scalar_lea.sflag [#allocation5], 1
    %14 = vsyncpa %s13, 0
    %15 = vsyncpa [#allocation7], 0
    %s16 = scalar_lea.sflag [#allocation7], 1
    %17 = vsyncpa %s16, 0
    loop: start=0, step=1, limit=4
    $region2: #{tpu_custom_call.1} parent=1 // loop_pre_header
      _
    $region3: #{tpu_custom_call.1} parent=1 // loop_header
      %s19 = sphi 0, %s23
      %p20 = scmp.ge.s32.totalorder %s19, 4
      %s26 = sphi 0, %s38
      %s27 = sphi 0, %s34
      %s28 = sphi 0, %s26
      %s29 = sphi 0, %s27
      %s30 = sphi 0, %s28
      %s31 = sphi 0, %s29
      %s41 = sphi 0, %s43
      %s44 = sphi 0, %s41
      %s45 = sphi 0, %s44
      %s61 = sphi 0, %s45
      %s65 = sphi 0, %s65
      %s67 = sphi 0, %s65
      %s68 = sphi 0, %s67
      %s82 = sphi 0, %s68
      %s86 = sphi 0, %s86
      %s88 = sphi 0, %s86
      %s89 = sphi 0, %s88
      %s103 = sphi 0, %s89
      %s107 = sphi 0, %s107
      %s109 = sphi 0, %s107
      %s110 = sphi 0, %s109
      %s124 = sphi 0, %s110
      %s132 = sphi 0, %s134
      %s135 = sphi 0, %s132
      %s136 = sphi 0, %s135
      %s152 = sphi 0, %s136
      %s160 = sphi 0, %s162
      %s163 = sphi 0, %s160
      %s164 = sphi 0, %s163
      %s180 = sphi 0, %s164
    $region4: #{tpu_custom_call.1} parent=1 // loop_header_branch
      %22 = sbr.rel (%p20) target = $region8
    $region5: #{tpu_custom_call.1} parent=1 // loop_body
      %s24 = ssub.s32 %s19, 1
      %s25 = ssub.s32 %s19, 2
      %s32 = sadd.s32 1, %s27
      %p33 = scmp.ge.s32.totalorder %s32, 1
      %s34 = scalar_select %p33, 0, %s32
      %s35 = sadd.s32 1, %s26
      %s36 = scalar_select %p33, %s35, %s26
      %p37 = scmp.ge.s32.totalorder %s36, 2
      %s38 = scalar_select %p37, 0, %s36
      %s39 = ssub.s32 %s26, %s38
      %p40 = scmp.eq.s32.totalorder %s39, 0
      %s42 = sadd.s32 %s41, 1
      %s43 = scalar_select %p40, %s41, %s42
      %p46 = pneg %p40
      %p47 = scmp.eq.s32.totalorder %s19, 1
      %p48 = por %p46, %p47
      %p49 = scmp.ne.s32.totalorder %s41, %s44
      %p50 = scmp.eq.s32.totalorder %s19, 0
      %p51 = por %p49, %p50
      %p52 = scmp.ne.s32.totalorder %s41, %s44
      %p53 = scmp.eq.s32.totalorder %s24, 1
      %p54 = por %p52, %p53
      %p55 = scmp.ne.s32.totalorder %s44, %s45
      %p56 = scmp.eq.s32.totalorder %s24, 0
      %p57 = por %p55, %p56
      %p58 = scmp.ne.s32.totalorder %s44, %s45
      %p59 = scmp.eq.s32.totalorder %s25, 1
      %p60 = por %p58, %p59
      %p62 = scmp.ne.s32.totalorder %s45, %s61
      %p63 = scmp.eq.s32.totalorder %s25, 0
      %p64 = por %p62, %p63
      %s66 = sadd.s32 %s65, 1
      %p69 = scmp.eq.s32.totalorder %s19, 1
      %p70 = scmp.ne.s32.totalorder %s65, %s67
      %p71 = scmp.eq.s32.totalorder %s19, 0
      %p72 = por %p70, %p71
      %p73 = scmp.ne.s32.totalorder %s65, %s67
      %p74 = scmp.eq.s32.totalorder %s24, 1
      %p75 = por %p73, %p74
      %p76 = scmp.ne.s32.totalorder %s67, %s68
      %p77 = scmp.eq.s32.totalorder %s24, 0
      %p78 = por %p76, %p77
      %p79 = scmp.ne.s32.totalorder %s67, %s68
      %p80 = scmp.eq.s32.totalorder %s25, 1
      %p81 = por %p79, %p80
      %p83 = scmp.ne.s32.totalorder %s68, %s82
      %p84 = scmp.eq.s32.totalorder %s25, 0
      %p85 = por %p83, %p84
      %s87 = sadd.s32 %s86, 1
      %p90 = scmp.eq.s32.totalorder %s19, 1
      %p91 = scmp.ne.s32.totalorder %s86, %s88
      %p92 = scmp.eq.s32.totalorder %s19, 0
      %p93 = por %p91, %p92
      %p94 = scmp.ne.s32.totalorder %s86, %s88
      %p95 = scmp.eq.s32.totalorder %s24, 1
      %p96 = por %p94, %p95
      %p97 = scmp.ne.s32.totalorder %s88, %s89
      %p98 = scmp.eq.s32.totalorder %s24, 0
      %p99 = por %p97, %p98
      %p100 = scmp.ne.s32.totalorder %s88, %s89
      %p101 = scmp.eq.s32.totalorder %s25, 1
      %p102 = por %p100, %p101
      %p104 = scmp.ne.s32.totalorder %s89, %s103
      %p105 = scmp.eq.s32.totalorder %s25, 0
      %p106 = por %p104, %p105
      %s108 = sadd.s32 %s107, 1
      %p111 = scmp.eq.s32.totalorder %s19, 1
      %p112 = scmp.ne.s32.totalorder %s107, %s109
      %p113 = scmp.eq.s32.totalorder %s19, 0
      %p114 = por %p112, %p113
      %p115 = scmp.ne.s32.totalorder %s107, %s109
      %p116 = scmp.eq.s32.totalorder %s24, 1
      %p117 = por %p115, %p116
      %p118 = scmp.ne.s32.totalorder %s109, %s110
      %p119 = scmp.eq.s32.totalorder %s24, 0
      %p120 = por %p118, %p119
      %p121 = scmp.ne.s32.totalorder %s109, %s110
      %p122 = scmp.eq.s32.totalorder %s25, 1
      %p123 = por %p121, %p122
      %p125 = scmp.ne.s32.totalorder %s110, %s124
      %p126 = scmp.eq.s32.totalorder %s25, 0
      %p127 = por %p125, %p126
      %s128 = ssub.s32 %s26, %s38
      %s129 = ssub.s32 %s27, %s34
      %s130 = sor.u32 %s128, %s129
      %p131 = scmp.eq.s32.totalorder %s130, 0
      %s133 = sadd.s32 %s132, 1
      %s134 = scalar_select %p131, %s132, %s133
      %p137 = pneg %p131
      %p138 = scmp.eq.s32.totalorder %s19, 1
      %p139 = por %p137, %p138
      %p140 = scmp.ne.s32.totalorder %s132, %s135
      %p141 = scmp.eq.s32.totalorder %s19, 0
      %p142 = por %p140, %p141
      %p143 = scmp.ne.s32.totalorder %s132, %s135
      %p144 = scmp.eq.s32.totalorder %s24, 1
      %p145 = por %p143, %p144
      %p146 = scmp.ne.s32.totalorder %s135, %s136
      %p147 = scmp.eq.s32.totalorder %s24, 0
      %p148 = por %p146, %p147
      %p149 = scmp.ne.s32.totalorder %s135, %s136
      %p150 = scmp.eq.s32.totalorder %s25, 1
      %p151 = por %p149, %p150
      %p153 = scmp.ne.s32.totalorder %s136, %s152
      %p154 = scmp.eq.s32.totalorder %s25, 0
      %p155 = por %p153, %p154
      %s156 = ssub.s32 %s26, %s38
      %s157 = ssub.s32 %s27, %s34
      %s158 = sor.u32 %s156, %s157
      %p159 = scmp.eq.s32.totalorder %s158, 0
      %s161 = sadd.s32 %s160, 1
      %s162 = scalar_select %p159, %s160, %s161
      %p165 = pneg %p159
      %p166 = scmp.eq.s32.totalorder %s19, 1
      %p167 = por %p165, %p166
      %p168 = scmp.ne.s32.totalorder %s160, %s163
      %p169 = scmp.eq.s32.totalorder %s19, 0
      %p170 = por %p168, %p169
      %p171 = scmp.ne.s32.totalorder %s160, %s163
      %p172 = scmp.eq.s32.totalorder %s24, 1
      %p173 = por %p171, %p172
      %p174 = scmp.ne.s32.totalorder %s163, %s164
      %p175 = scmp.eq.s32.totalorder %s24, 0
      %p176 = por %p174, %p175
      %p177 = scmp.ne.s32.totalorder %s163, %s164
      %p178 = scmp.eq.s32.totalorder %s25, 1
      %p179 = por %p177, %p178
      %p181 = scmp.ne.s32.totalorder %s164, %s180
      %p182 = scmp.eq.s32.totalorder %s25, 0
      %p183 = por %p181, %p182
      %p184 = scmp.le.s32.totalorder 1, %s19
      %p185 = scmp.lt.s32.totalorder %s19, 3
      %p186 = pnand %p184, %p185
      %p187 = pneg %p186
      // Predicated region
      $region9: #{tpu_custom_call.1} parent=5 // pred_check
        _
      $region10: #{tpu_custom_call.1} parent=5 // pred_check_branch
        %189 = sbr.rel (%p186) target = $region12
      $region11: #{tpu_custom_call.1} parent=5 // pred_region
        %s190 = ssub.s32 %s19, 1
        // Predicated region
        $region13: #{tpu_custom_call.1} parent=11 // pred_check
          %p191 = pneg %p78
        $region14: #{tpu_custom_call.1} parent=11 // pred_check_branch
          %193 = sbr.rel (%p191) target = $region16
        $region15: #{tpu_custom_call.1} parent=11 // pred_region
          _
        $region16: #{tpu_custom_call.1} parent=11 // pred_fallthru
          _
        // Predicated region
        $region17: #{tpu_custom_call.1} parent=11 // pred_check
          %p194 = pneg %p99
        $region18: #{tpu_custom_call.1} parent=11 // pred_check_branch
          %196 = sbr.rel (%p194) target = $region20
        $region19: #{tpu_custom_call.1} parent=11 // pred_region
          _
        $region20: #{tpu_custom_call.1} parent=11 // pred_fallthru
          _
        // Predicated region
        $region21: #{tpu_custom_call.1} parent=11 // pred_check
          %p197 = pneg %p120
        $region22: #{tpu_custom_call.1} parent=11 // pred_check_branch
          %199 = sbr.rel (%p197) target = $region24
        $region23: #{tpu_custom_call.1} parent=11 // pred_region
          _
        $region24: #{tpu_custom_call.1} parent=11 // pred_fallthru
          _
      $region12: #{tpu_custom_call.1} parent=5 // pred_fallthru
        _
      %p200 = scmp.lt.s32.totalorder %s19, 2
      // Predicated region
      $region25: #{tpu_custom_call.1} parent=5 // pred_check
        %p201 = pneg %p200
      $region26: #{tpu_custom_call.1} parent=5 // pred_check_branch
        %203 = sbr.rel (%p201) target = $region28
      $region27: #{tpu_custom_call.1} parent=5 // pred_region
        // Predicated region
        $region29: #{tpu_custom_call.1} parent=27 // pred_check
          %p204 = pneg %p51
        $region30: #{tpu_custom_call.1} parent=27 // pred_check_branch
          %206 = sbr.rel (%p204) target = $region32
        $region31: #{tpu_custom_call.1} parent=27 // pred_region
          %p207 = scmp.lt.s32.totalorder %s26, 1
          %s208 = scalar_select %p207, %s26, 1
          %s209 = smul.addr %s208, 2
          %s210 = smul.addr %s209, 4
          %s211 = scalar_lea.vmem %s0, %s210
        $region32: #{tpu_custom_call.1} parent=27 // pred_fallthru
          _
      $region28: #{tpu_custom_call.1} parent=5 // pred_fallthru
        _
      %p212 = scmp.le.s32.totalorder 1, %s19
      %p213 = scmp.lt.s32.totalorder %s19, 3
      %p214 = pnand %p212, %p213
      %p215 = pneg %p214
      // Predicated region
      $region33: #{tpu_custom_call.1} parent=5 // pred_check
        _
      $region34: #{tpu_custom_call.1} parent=5 // pred_check_branch
        %217 = sbr.rel (%p214) target = $region36
      $region35: #{tpu_custom_call.1} parent=5 // pred_region
        %s218 = ssub.s32 %s19, 1
        %p219 = scmp.lt.s32.totalorder %s28, 1
        %s220 = scalar_select %p219, %s28, 1
        %s221 = smul.addr %s220, 2
        %s222 = smul.addr %s221, 4
        %s223 = scalar_lea.vmem %s0, %s222
        %p224 = pneg %p57
        %p225 = pneg %p54
        %p226 = pneg %p78
        %p227 = pneg %p75
        %p228 = pneg %p99
        %p229 = pneg %p96
        %p230 = pneg %p120
        %p231 = pneg %p117
        %p232 = pneg %p148
        %p233 = pneg %p145
        %s234 = sand.u32 %s135, 1
        %s235 = scalar_lea.sflag [#allocation5], %s234
        %s236 = sand.u32 %s135, 1
        %s237 = smul.addr %s236, 8
        %s238 = scalar_lea.vmem [#allocation4], %s237
        %p239 = pneg %p176
        %p240 = pneg %p173
        %s241 = sand.u32 %s163, 1
        %s242 = scalar_lea.sflag [#allocation7], %s241
        %s243 = sand.u32 %s163, 1
        %s244 = smul.addr %s243, 512
        %s245 = scalar_lea.vmem [#allocation6], %s244
        %p246 = scmp.lt.s32.totalorder %s28, 1
        %s247 = scalar_select %p246, %s28, 1
        %s248 = smul.addr %s247, 2
        %s249 = smul.addr %s248, 4
        %s250 = scalar_lea.vmem %s0, %s249
        %s251 = smul.u32 2, %s29
        %s252 = smul.u32 32, %s29
        %s254 = smul.u32 %s29, 256
        %p255 = scmp.eq.s32.totalorder %s29, 0
        // Predicated region
        $region37: #{tpu_custom_call.1} parent=35 // pred_check
          %p256 = pneg %p255
        $region38: #{tpu_custom_call.1} parent=35 // pred_check_branch
          %258 = sbr.rel (%p256) target = $region40
        $region39: #{tpu_custom_call.1} parent=35 // pred_region
          %v259 = vld [vmem:[%s1] sm:$0xff]
          %v260 = vld [vmem:[%s1 + $0x8] sm:$0xf]
          %v261 = vld [vmem:[%s250] sm:$0xff]
          %v262 = vld [vmem:[%s2] sm:$0xff]
          %v263 = vld [vmem:[%s2 + $0x8] sm:$0xf]
          %265 = vset.pattern.permute.xlu0 0
          %266 = vperm.xlu0 %265, %v262
          %v267 = vpop.permute.xlu0 %266
          %270 = vset.pattern.permute.xlu0 0
          %271 = vperm.xlu0 %270, %v263
          %v272 = vpop.permute.xlu0 %271
          %v275 = vcombine.high %v261, %v261
          %vm276 = vcmask 31744
          %v278 = vsel %vm276, %v259, 0
          %v281 = vsel %vm276, %v260, 0
          %vm283 = vcmask 1043456
          %v284 = vsel %vm283, %v261, 0
          %v286 = vsel %vm283, %v275, 0
          %288 = vmatprep.subr.mxu0 0.0
          %289 = vmatpush1.msra.mxu0 0.0
          %290 = vmatprep.subr.mxu0 0.0
          %291 = vmatpush1.msra.mxu0 0.0
          %292 = vmatprep.subr.mxu0 0.0
          %293 = vmatpush1.msra.mxu0 0.0
          %294 = vmatprep.subr.mxu0 0.0
          %295 = vmatpush1.msra.mxu0 0.0
          %296 = vmatprep.subr.mxu0 0.0
          %297 = vmatpush1.msra.mxu0 0.0
          %298 = vmatprep.subr.mxu0 0.0
          %299 = vmatpush1.msra.mxu0 0.0
          %300 = vmatprep.subr.mxu0 0.0
          %301 = vmatpush1.msra.mxu0 0.0
          %302 = vmatprep.subr.mxu0 0.0
          %303 = vmatpush1.msra.mxu0 0.0
          %304 = vmatprep.subr.mxu0 0.0
          %305 = vmatpush1.msra.mxu0 0.0
          %306 = vmatprep.subr.mxu0 0.0
          %307 = vmatpush1.msra.mxu0 0.0
          %308 = vmatprep.subr.mxu0 0.0
          %309 = vmatpush1.msra.mxu0 0.0
          %310 = vmatprep.subr.mxu0 0.0
          %311 = vmatpush1.msra.mxu0 0.0
          %312 = vmatprep.subr.mxu0 0.0
          %313 = vmatpush1.msra.mxu0 0.0
          %314 = vmatprep.subr.mxu0 0.0
          %315 = vmatpush1.msra.mxu0 0.0
          %316 = vmatprep.subr.mxu0 0.0
          %317 = vmatpush1.msra.mxu0 0.0
          %318 = vmatprep.subr.mxu0 %v286
          %319 = vmatpush1.msra.mxu0 %v284
          %320 = vmatprep.subr.mxu0 0.0
          %321 = vmatpush2.msra.mxu0 0.0
          %322 = vmatprep.subr.mxu0 0.0
          %323 = vmatpush2.msra.mxu0 0.0
          %324 = vmatprep.subr.mxu0 0.0
          %325 = vmatpush2.msra.mxu0 0.0
          %326 = vmatprep.subr.mxu0 0.0
          %327 = vmatpush2.msra.mxu0 0.0
          %328 = vmatprep.subr.mxu0 0.0
          %329 = vmatpush2.msra.mxu0 0.0
          %330 = vmatprep.subr.mxu0 0.0
          %331 = vmatpush2.msra.mxu0 0.0
          %332 = vmatprep.subr.mxu0 0.0
          %333 = vmatpush2.msra.mxu0 0.0
          %334 = vmatprep.subr.mxu0 0.0
          %335 = vmatpush2.msra.mxu0 0.0
          %336 = vmatprep.subr.mxu0 0.0
          %337 = vmatpush2.msra.mxu0 0.0
          %338 = vmatprep.subr.mxu0 0.0
          %339 = vmatpush2.msra.mxu0 0.0
          %340 = vmatprep.subr.mxu0 0.0
          %341 = vmatpush2.msra.mxu0 0.0
          %342 = vmatprep.subr.mxu0 0.0
          %343 = vmatpush2.msra.mxu0 0.0
          %344 = vmatprep.subr.mxu0 0.0
          %345 = vmatpush2.msra.mxu0 0.0
          %346 = vmatprep.subr.mxu0 0.0
          %347 = vmatpush2.msra.mxu0 0.0
          %348 = vmatprep.subr.mxu0 0.0
          %349 = vmatpush2.msra.mxu0 0.0
          %350 = vmatprep.subr.mxu0 0.0
          %351 = vmatpush2.msra.mxu0 0.0
          %352 = vmatprep.mubr.f32.mxu0 0.0
          %353 = vmatmul.mubr.f32.gmra.mxu0 %v278
          %v354 = vpop.f32.mrf.mxu0
          %v355 = vadd.f32 %v267, %v354
          %v356 = vpop.f32.mrf.mxu0
          %v357 = vadd.f32 %v267, %v356
          %358 = vmatprep.mubr.f32.mxu0 0.0
          %359 = vmatmul.mubr.f32.gmra.mxu0 %v281
          %v360 = vpop.f32.mrf.mxu0
          %v361 = vadd.f32 %v272, %v360
          %v362 = vpop.f32.mrf.mxu0
          %v363 = vadd.f32 %v272, %v362
          %364 = vdwg.mxu0
          %v365 = vpack.c.bf16 %v361, %v355
          %v366 = vpack.c.bf16 %v363, %v357
          %v369 = vunpack.c.l.b16 %v365
          %v370 = vunpack.c.l.b16 %v366
          %v371 = vunpack.c.h.b16 %v365
          %v372 = vunpack.c.h.b16 %v366
          %v373 = vpack.c.b16 %v370, %v369
          %v374 = vpack.c.b16 %v372, %v371
          %377 = vst [vmem:[#allocation2] sm:$0xff] %v373
          %378 = vst [vmem:[#allocation2 + $0x8] sm:$0x33] %v374
        $region40: #{tpu_custom_call.1} parent=35 // pred_fallthru
          _
        %s379 = sshra.s32 %s254, 7
        %s380 = sand.u32 %s254, 127
        %s381 = smul.addr %s379, 4
        %s382 = scalar_lea.vmem [#allocation2], %s381
        %v383 = vld [vmem:[%s382] sm:$0x33]
        %v384 = vld [vmem:[#allocation2] sm:$0xcc]
        %v385 = vld [vmem:[#allocation2 + $0x8] sm:$0x33]
        %v387 = vunpack.c.l.b16 %v383
        %v388 = vunpack.c.h.b16 %v383
        %v389 = vpack.c.b16 %v387, %v387
        %v390 = vpack.c.b16 %v388, %v388
        %393 = vxpose.xlu0.c.b16.start [1/8] %v389, 128
        %394 = vxpose.xlu0.c.b16.cont [2/8] 0, 128
        %395 = vxpose.xlu0.c.b16.cont [3/8] 0, 128
        %396 = vxpose.xlu0.c.b16.cont [4/8] 0, 128
        %397 = vxpose.xlu0.c.b16.cont [5/8] 0, 128
        %398 = vxpose.xlu0.c.b16.cont [6/8] 0, 128
        %399 = vxpose.xlu0.c.b16.cont [7/8] 0, 128
        %400 = vxpose.xlu0.c.b16.end [8/8] 0, 128
        %v401 = vpop.trf.xlu0
        %v402 = vpop.trf.xlu0
        %v403 = vpop.trf.xlu0
        %v404 = vpop.trf.xlu0
        %v405 = vpop.trf.xlu0
        %v406 = vpop.trf.xlu0
        %v407 = vpop.trf.xlu0
        %v408 = vpop.trf.xlu0
        %409 = vxpose.xlu0.c.b16.start [1/8] %v390, 128
        %410 = vxpose.xlu0.c.b16.cont [2/8] 0, 128
        %411 = vxpose.xlu0.c.b16.cont [3/8] 0, 128
        %412 = vxpose.xlu0.c.b16.cont [4/8] 0, 128
        %413 = vxpose.xlu0.c.b16.cont [5/8] 0, 128
        %414 = vxpose.xlu0.c.b16.cont [6/8] 0, 128
        %415 = vxpose.xlu0.c.b16.cont [7/8] 0, 128
        %416 = vxpose.xlu0.c.b16.end [8/8] 0, 128
        %v417 = vpop.trf.xlu0
        %v418 = vpop.trf.xlu0
        %v419 = vpop.trf.xlu0
        %v420 = vpop.trf.xlu0
        %v421 = vpop.trf.xlu0
        %v422 = vpop.trf.xlu0
        %v423 = vpop.trf.xlu0
        %v424 = vpop.trf.xlu0
        %v426 = vunpack.c.l.b16 %v384
        %v427 = vunpack.c.h.b16 %v384
        %v428 = vpack.c.b16 %v426, %v426
        %v429 = vpack.c.b16 %v427, %v427
        %v430 = vrot.slane %v428, 2
        %v431 = vrot.slane %v429, 2
        %vm432 = vcmask 31744
        %v434 = vsel %vm432, %v401, 0
        %v437 = vsel %vm432, %v402, 0
        %v440 = vsel %vm432, %v403, 0
        %v443 = vsel %vm432, %v404, 0
        %v446 = vsel %vm432, %v405, 0
        %v449 = vsel %vm432, %v406, 0
        %v452 = vsel %vm432, %v407, 0
        %v455 = vsel %vm432, %v408, 0
        %v458 = vsel %vm432, %v417, 0
        %v461 = vsel %vm432, %v418, 0
        %v464 = vsel %vm432, %v419, 0
        %v467 = vsel %vm432, %v420, 0
        %v470 = vsel %vm432, %v421, 0
        %v473 = vsel %vm432, %v422, 0
        %v476 = vsel %vm432, %v423, 0
        %v479 = vsel %vm432, %v424, 0
        %vm481 = vcmask 1041408
        %v483 = vsel %vm481, %v430, 0
        %v486 = vsel %vm481, %v431, 0
        %488 = vmatprep.subr.bf16.mxu0 0
        %489 = vmatpush1.bf16.msra.mxu0 0
        %490 = vmatprep.subr.bf16.mxu0 0
        %491 = vmatpush1.bf16.msra.mxu0 0
        %492 = vmatprep.subr.bf16.mxu0 0
        %493 = vmatpush1.bf16.msra.mxu0 0
        %494 = vmatprep.subr.bf16.mxu0 0
        %495 = vmatpush1.bf16.msra.mxu0 0
        %496 = vmatprep.subr.bf16.mxu0 0
        %497 = vmatpush1.bf16.msra.mxu0 0
        %498 = vmatprep.subr.bf16.mxu0 0
        %499 = vmatpush1.bf16.msra.mxu0 0
        %500 = vmatprep.subr.bf16.mxu0 0
        %501 = vmatpush1.bf16.msra.mxu0 0
        %502 = vmatprep.subr.bf16.mxu0 %v486
        %503 = vmatpush1.bf16.msra.mxu0 %v483
        %504 = vmatprep.subr.bf16.mxu0 0
        %505 = vmatpush2.bf16.msra.mxu0 0
        %506 = vmatprep.subr.bf16.mxu0 0
        %507 = vmatpush2.bf16.msra.mxu0 0
        %508 = vmatprep.subr.bf16.mxu0 0
        %509 = vmatpush2.bf16.msra.mxu0 0
        %510 = vmatprep.subr.bf16.mxu0 0
        %511 = vmatpush2.bf16.msra.mxu0 0
        %512 = vmatprep.subr.bf16.mxu0 0
        %513 = vmatpush2.bf16.msra.mxu0 0
        %514 = vmatprep.subr.bf16.mxu0 0
        %515 = vmatpush2.bf16.msra.mxu0 0
        %516 = vmatprep.subr.bf16.mxu0 0
        %517 = vmatpush2.bf16.msra.mxu0 0
        %518 = vmatprep.subr.bf16.mxu0 0
        %519 = vmatpush2.bf16.msra.mxu0 0
        %520 = vmatprep.mubr.bf16.mxu0 0
        %521 = vmatmul.mubr.bf16.gmra.mxu0 %v434
        %v522 = vpop.f32.mrf.mxu0
        %v523 = vadd.f32 0.0, %v522
        %v524 = vpop.f32.mrf.mxu0
        %v525 = vadd.f32 0.0, %v524
        %v526 = vpop.f32.mrf.mxu0
        %v527 = vadd.f32 0.0, %v526
        %v528 = vpop.f32.mrf.mxu0
        %v529 = vadd.f32 0.0, %v528
        %530 = vmatprep.mubr.bf16.mxu0 0
        %531 = vmatmul.mubr.bf16.gmra.mxu0 %v437
        %v532 = vpop.f32.mrf.mxu0
        %v533 = vadd.f32 0.0, %v532
        %v534 = vpop.f32.mrf.mxu0
        %v535 = vadd.f32 0.0, %v534
        %v536 = vpop.f32.mrf.mxu0
        %v537 = vadd.f32 0.0, %v536
        %v538 = vpop.f32.mrf.mxu0
        %v539 = vadd.f32 0.0, %v538
        %540 = vmatprep.mubr.bf16.mxu0 0
        %541 = vmatmul.mubr.bf16.gmra.mxu0 %v440
        %v542 = vpop.f32.mrf.mxu0
        %v543 = vadd.f32 0.0, %v542
        %v544 = vpop.f32.mrf.mxu0
        %v545 = vadd.f32 0.0, %v544
        %v546 = vpop.f32.mrf.mxu0
        %v547 = vadd.f32 0.0, %v546
        %v548 = vpop.f32.mrf.mxu0
        %v549 = vadd.f32 0.0, %v548
        %550 = vmatprep.mubr.bf16.mxu0 0
        %551 = vmatmul.mubr.bf16.gmra.mxu0 %v443
        %v552 = vpop.f32.mrf.mxu0
        %v553 = vadd.f32 0.0, %v552
        %v554 = vpop.f32.mrf.mxu0
        %v555 = vadd.f32 0.0, %v554
        %v556 = vpop.f32.mrf.mxu0
        %v557 = vadd.f32 0.0, %v556
        %v558 = vpop.f32.mrf.mxu0
        %v559 = vadd.f32 0.0, %v558
        %560 = vmatprep.mubr.bf16.mxu0 0
        %561 = vmatmul.mubr.bf16.gmra.mxu0 %v446
        %v562 = vpop.f32.mrf.mxu0
        %v563 = vadd.f32 0.0, %v562
        %v564 = vpop.f32.mrf.mxu0
        %v565 = vadd.f32 0.0, %v564
        %v566 = vpop.f32.mrf.mxu0
        %v567 = vadd.f32 0.0, %v566
        %v568 = vpop.f32.mrf.mxu0
        %v569 = vadd.f32 0.0, %v568
        %570 = vmatprep.mubr.bf16.mxu0 0
        %571 = vmatmul.mubr.bf16.gmra.mxu0 %v449
        %v572 = vpop.f32.mrf.mxu0
        %v573 = vadd.f32 0.0, %v572
        %v574 = vpop.f32.mrf.mxu0
        %v575 = vadd.f32 0.0, %v574
        %v576 = vpop.f32.mrf.mxu0
        %v577 = vadd.f32 0.0, %v576
        %v578 = vpop.f32.mrf.mxu0
        %v579 = vadd.f32 0.0, %v578
        %580 = vmatprep.mubr.bf16.mxu0 0
        %581 = vmatmul.mubr.bf16.gmra.mxu0 %v452
        %v582 = vpop.f32.mrf.mxu0
        %v583 = vadd.f32 0.0, %v582
        %v584 = vpop.f32.mrf.mxu0
        %v585 = vadd.f32 0.0, %v584
        %v586 = vpop.f32.mrf.mxu0
        %v587 = vadd.f32 0.0, %v586
        %v588 = vpop.f32.mrf.mxu0
        %v589 = vadd.f32 0.0, %v588
        %590 = vmatprep.mubr.bf16.mxu0 0
        %591 = vmatmul.mubr.bf16.gmra.mxu0 %v455
        %v592 = vpop.f32.mrf.mxu0
        %v593 = vadd.f32 0.0, %v592
        %v594 = vpop.f32.mrf.mxu0
        %v595 = vadd.f32 0.0, %v594
        %v596 = vpop.f32.mrf.mxu0
        %v597 = vadd.f32 0.0, %v596
        %v598 = vpop.f32.mrf.mxu0
        %v599 = vadd.f32 0.0, %v598
        %600 = vmatprep.mubr.bf16.mxu0 0
        %601 = vmatmul.mubr.bf16.gmra.mxu0 %v458
        %v602 = vpop.f32.mrf.mxu0
        %v603 = vadd.f32 0.0, %v602
        %v604 = vpop.f32.mrf.mxu0
        %v605 = vadd.f32 0.0, %v604
        %v606 = vpop.f32.mrf.mxu0
        %v607 = vadd.f32 0.0, %v606
        %v608 = vpop.f32.mrf.mxu0
        %v609 = vadd.f32 0.0, %v608
        %610 = vmatprep.mubr.bf16.mxu0 0
        %611 = vmatmul.mubr.bf16.gmra.mxu0 %v461
        %v612 = vpop.f32.mrf.mxu0
        %v613 = vadd.f32 0.0, %v612
        %v614 = vpop.f32.mrf.mxu0
        %v615 = vadd.f32 0.0, %v614
        %v616 = vpop.f32.mrf.mxu0
        %v617 = vadd.f32 0.0, %v616
        %v618 = vpop.f32.mrf.mxu0
        %v619 = vadd.f32 0.0, %v618
        %620 = vmatprep.mubr.bf16.mxu0 0
        %621 = vmatmul.mubr.bf16.gmra.mxu0 %v464
        %v622 = vpop.f32.mrf.mxu0
        %v623 = vadd.f32 0.0, %v622
        %v624 = vpop.f32.mrf.mxu0
        %v625 = vadd.f32 0.0, %v624
        %v626 = vpop.f32.mrf.mxu0
        %v627 = vadd.f32 0.0, %v626
        %v628 = vpop.f32.mrf.mxu0
        %v629 = vadd.f32 0.0, %v628
        %630 = vmatprep.mubr.bf16.mxu0 0
        %631 = vmatmul.mubr.bf16.gmra.mxu0 %v467
        %v632 = vpop.f32.mrf.mxu0
        %v633 = vadd.f32 0.0, %v632
        %v634 = vpop.f32.mrf.mxu0
        %v635 = vadd.f32 0.0, %v634
        %v636 = vpop.f32.mrf.mxu0
        %v637 = vadd.f32 0.0, %v636
        %v638 = vpop.f32.mrf.mxu0
        %v639 = vadd.f32 0.0, %v638
        %640 = vmatprep.mubr.bf16.mxu0 0
        %641 = vmatmul.mubr.bf16.gmra.mxu0 %v470
        %v642 = vpop.f32.mrf.mxu0
        %v643 = vadd.f32 0.0, %v642
        %v644 = vpop.f32.mrf.mxu0
        %v645 = vadd.f32 0.0, %v644
        %v646 = vpop.f32.mrf.mxu0
        %v647 = vadd.f32 0.0, %v646
        %v648 = vpop.f32.mrf.mxu0
        %v649 = vadd.f32 0.0, %v648
        %650 = vmatprep.mubr.bf16.mxu0 0
        %651 = vmatmul.mubr.bf16.gmra.mxu0 %v473
        %v652 = vpop.f32.mrf.mxu0
        %v653 = vadd.f32 0.0, %v652
        %v654 = vpop.f32.mrf.mxu0
        %v655 = vadd.f32 0.0, %v654
        %v656 = vpop.f32.mrf.mxu0
        %v657 = vadd.f32 0.0, %v656
        %v658 = vpop.f32.mrf.mxu0
        %v659 = vadd.f32 0.0, %v658
        %660 = vmatprep.mubr.bf16.mxu0 0
        %661 = vmatmul.mubr.bf16.gmra.mxu0 %v476
        %v662 = vpop.f32.mrf.mxu0
        %v663 = vadd.f32 0.0, %v662
        %v664 = vpop.f32.mrf.mxu0
        %v665 = vadd.f32 0.0, %v664
        %v666 = vpop.f32.mrf.mxu0
        %v667 = vadd.f32 0.0, %v666
        %v668 = vpop.f32.mrf.mxu0
        %v669 = vadd.f32 0.0, %v668
        %670 = vmatprep.mubr.bf16.mxu0 0
        %671 = vmatmul.mubr.bf16.gmra.mxu0 %v479
        %v672 = vpop.f32.mrf.mxu0
        %v673 = vadd.f32 0.0, %v672
        %v674 = vpop.f32.mrf.mxu0
        %v675 = vadd.f32 0.0, %v674
        %v676 = vpop.f32.mrf.mxu0
        %v677 = vadd.f32 0.0, %v676
        %v678 = vpop.f32.mrf.mxu0
        %v679 = vadd.f32 0.0, %v678
        %680 = vdwg.mxu0
        %v681 = vmax.f32 %v523, %v525
        %682 = vmax.xlane.f32.xlu0 %v681
        %v683 = vpop.xlane.xlu0 %682
        %v684 = vmax.f32 %v527, %v529
        %685 = vmax.xlane.f32.xlu0 %v684
        %v686 = vpop.xlane.xlu0 %685
        %v687 = vmax.f32 %v533, %v535
        %688 = vmax.xlane.f32.xlu0 %v687
        %v689 = vpop.xlane.xlu0 %688
        %v690 = vmax.f32 %v537, %v539
        %691 = vmax.xlane.f32.xlu0 %v690
        %v692 = vpop.xlane.xlu0 %691
        %v693 = vmax.f32 %v543, %v545
        %694 = vmax.xlane.f32.xlu0 %v693
        %v695 = vpop.xlane.xlu0 %694
        %v696 = vmax.f32 %v547, %v549
        %697 = vmax.xlane.f32.xlu0 %v696
        %v698 = vpop.xlane.xlu0 %697
        %v699 = vmax.f32 %v553, %v555
        %700 = vmax.xlane.f32.xlu0 %v699
        %v701 = vpop.xlane.xlu0 %700
        %v702 = vmax.f32 %v557, %v559
        %703 = vmax.xlane.f32.xlu0 %v702
        %v704 = vpop.xlane.xlu0 %703
        %v705 = vmax.f32 %v563, %v565
        %706 = vmax.xlane.f32.xlu0 %v705
        %v707 = vpop.xlane.xlu0 %706
        %v708 = vmax.f32 %v567, %v569
        %709 = vmax.xlane.f32.xlu0 %v708
        %v710 = vpop.xlane.xlu0 %709
        %v711 = vmax.f32 %v573, %v575
        %712 = vmax.xlane.f32.xlu0 %v711
        %v713 = vpop.xlane.xlu0 %712
        %v714 = vmax.f32 %v577, %v579
        %715 = vmax.xlane.f32.xlu0 %v714
        %v716 = vpop.xlane.xlu0 %715
        %v717 = vmax.f32 %v583, %v585
        %718 = vmax.xlane.f32.xlu0 %v717
        %v719 = vpop.xlane.xlu0 %718
        %v720 = vmax.f32 %v587, %v589
        %721 = vmax.xlane.f32.xlu0 %v720
        %v722 = vpop.xlane.xlu0 %721
        %v723 = vmax.f32 %v593, %v595
        %724 = vmax.xlane.f32.xlu0 %v723
        %v725 = vpop.xlane.xlu0 %724
        %v726 = vmax.f32 %v597, %v599
        %727 = vmax.xlane.f32.xlu0 %v726
        %v728 = vpop.xlane.xlu0 %727
        %v729 = vmax.f32 %v603, %v605
        %730 = vmax.xlane.f32.xlu0 %v729
        %v731 = vpop.xlane.xlu0 %730
        %v732 = vmax.f32 %v607, %v609
        %733 = vmax.xlane.f32.xlu0 %v732
        %v734 = vpop.xlane.xlu0 %733
        %v735 = vmax.f32 %v613, %v615
        %736 = vmax.xlane.f32.xlu0 %v735
        %v737 = vpop.xlane.xlu0 %736
        %v738 = vmax.f32 %v617, %v619
        %739 = vmax.xlane.f32.xlu0 %v738
        %v740 = vpop.xlane.xlu0 %739
        %v741 = vmax.f32 %v623, %v625
        %742 = vmax.xlane.f32.xlu0 %v741
        %v743 = vpop.xlane.xlu0 %742
        %v744 = vmax.f32 %v627, %v629
        %745 = vmax.xlane.f32.xlu0 %v744
        %v746 = vpop.xlane.xlu0 %745
        %v747 = vmax.f32 %v633, %v635
        %748 = vmax.xlane.f32.xlu0 %v747
        %v749 = vpop.xlane.xlu0 %748
        %v750 = vmax.f32 %v637, %v639
        %751 = vmax.xlane.f32.xlu0 %v750
        %v752 = vpop.xlane.xlu0 %751
        %v753 = vmax.f32 %v643, %v645
        %754 = vmax.xlane.f32.xlu0 %v753
        %v755 = vpop.xlane.xlu0 %754
        %v756 = vmax.f32 %v647, %v649
        %757 = vmax.xlane.f32.xlu0 %v756
        %v758 = vpop.xlane.xlu0 %757
        %v759 = vmax.f32 %v653, %v655
        %760 = vmax.xlane.f32.xlu0 %v759
        %v761 = vpop.xlane.xlu0 %760
        %v762 = vmax.f32 %v657, %v659
        %763 = vmax.xlane.f32.xlu0 %v762
        %v764 = vpop.xlane.xlu0 %763
        %v765 = vmax.f32 %v663, %v665
        %766 = vmax.xlane.f32.xlu0 %v765
        %v767 = vpop.xlane.xlu0 %766
        %v768 = vmax.f32 %v667, %v669
        %769 = vmax.xlane.f32.xlu0 %v768
        %v770 = vpop.xlane.xlu0 %769
        %v771 = vmax.f32 %v673, %v675
        %772 = vmax.xlane.f32.xlu0 %v771
        %v773 = vpop.xlane.xlu0 %772
        %v774 = vmax.f32 %v677, %v679
        %775 = vmax.xlane.f32.xlu0 %v774
        %v776 = vpop.xlane.xlu0 %775
        %v777 = vsub.f32 %v523, %v683
        %v778 = vsub.f32 %v525, %v683
        %v779 = vsub.f32 %v527, %v686
        %v780 = vsub.f32 %v529, %v686
        %v781 = vsub.f32 %v533, %v689
        %v782 = vsub.f32 %v535, %v689
        %v783 = vsub.f32 %v537, %v692
        %v784 = vsub.f32 %v539, %v692
        %v785 = vsub.f32 %v543, %v695
        %v786 = vsub.f32 %v545, %v695
        %v787 = vsub.f32 %v547, %v698
        %v788 = vsub.f32 %v549, %v698
        %v789 = vsub.f32 %v553, %v701
        %v790 = vsub.f32 %v555, %v701
        %v791 = vsub.f32 %v557, %v704
        %v792 = vsub.f32 %v559, %v704
        %v793 = vsub.f32 %v563, %v707
        %v794 = vsub.f32 %v565, %v707
        %v795 = vsub.f32 %v567, %v710
        %v796 = vsub.f32 %v569, %v710
        %v797 = vsub.f32 %v573, %v713
        %v798 = vsub.f32 %v575, %v713
        %v799 = vsub.f32 %v577, %v716
        %v800 = vsub.f32 %v579, %v716
        %v801 = vsub.f32 %v583, %v719
        %v802 = vsub.f32 %v585, %v719
        %v803 = vsub.f32 %v587, %v722
        %v804 = vsub.f32 %v589, %v722
        %v805 = vsub.f32 %v593, %v725
        %v806 = vsub.f32 %v595, %v725
        %v807 = vsub.f32 %v597, %v728
        %v808 = vsub.f32 %v599, %v728
        %v809 = vsub.f32 %v603, %v731
        %v810 = vsub.f32 %v605, %v731
        %v811 = vsub.f32 %v607, %v734
        %v812 = vsub.f32 %v609, %v734
        %v813 = vsub.f32 %v613, %v737
        %v814 = vsub.f32 %v615, %v737
        %v815 = vsub.f32 %v617, %v740
        %v816 = vsub.f32 %v619, %v740
        %v817 = vsub.f32 %v623, %v743
        %v818 = vsub.f32 %v625, %v743
        %v819 = vsub.f32 %v627, %v746
        %v820 = vsub.f32 %v629, %v746
        %v821 = vsub.f32 %v633, %v749
        %v822 = vsub.f32 %v635, %v749
        %v823 = vsub.f32 %v637, %v752
        %v824 = vsub.f32 %v639, %v752
        %v825 = vsub.f32 %v643, %v755
        %v826 = vsub.f32 %v645, %v755
        %v827 = vsub.f32 %v647, %v758
        %v828 = vsub.f32 %v649, %v758
        %v829 = vsub.f32 %v653, %v761
        %v830 = vsub.f32 %v655, %v761
        %v831 = vsub.f32 %v657, %v764
        %v832 = vsub.f32 %v659, %v764
        %v833 = vsub.f32 %v663, %v767
        %v834 = vsub.f32 %v665, %v767
        %v835 = vsub.f32 %v667, %v770
        %v836 = vsub.f32 %v669, %v770
        %v837 = vsub.f32 %v673, %v773
        %v838 = vsub.f32 %v675, %v773
        %v839 = vsub.f32 %v677, %v776
        %v840 = vsub.f32 %v679, %v776
        %v841 = vmul.f32 %v777, 1.442695
        %v842 = vpow.pop %v841
        %v843 = vmul.f32 %v778, 1.442695
        %v844 = vpow.pop %v843
        %v845 = vmul.f32 %v779, 1.442695
        %v846 = vpow.pop %v845
        %v847 = vmul.f32 %v780, 1.442695
        %v848 = vpow.pop %v847
        %v849 = vmul.f32 %v781, 1.442695
        %v850 = vpow.pop %v849
        %v851 = vmul.f32 %v782, 1.442695
        %v852 = vpow.pop %v851
        %v853 = vmul.f32 %v783, 1.442695
        %v854 = vpow.pop %v853
        %v855 = vmul.f32 %v784, 1.442695
        %v856 = vpow.pop %v855
        %v857 = vmul.f32 %v785, 1.442695
        %v858 = vpow.pop %v857
        %v859 = vmul.f32 %v786, 1.442695
        %v860 = vpow.pop %v859
        %v861 = vmul.f32 %v787, 1.442695
        %v862 = vpow.pop %v861
        %v863 = vmul.f32 %v788, 1.442695
        %v864 = vpow.pop %v863
        %v865 = vmul.f32 %v789, 1.442695
        %v866 = vpow.pop %v865
        %v867 = vmul.f32 %v790, 1.442695
        %v868 = vpow.pop %v867
        %v869 = vmul.f32 %v791, 1.442695
        %v870 = vpow.pop %v869
        %v871 = vmul.f32 %v792, 1.442695
        %v872 = vpow.pop %v871
        %v873 = vmul.f32 %v793, 1.442695
        %v874 = vpow.pop %v873
        %v875 = vmul.f32 %v794, 1.442695
        %v876 = vpow.pop %v875
        %v877 = vmul.f32 %v795, 1.442695
        %v878 = vpow.pop %v877
        %v879 = vmul.f32 %v796, 1.442695
        %v880 = vpow.pop %v879
        %v881 = vmul.f32 %v797, 1.442695
        %v882 = vpow.pop %v881
        %v883 = vmul.f32 %v798, 1.442695
        %v884 = vpow.pop %v883
        %v885 = vmul.f32 %v799, 1.442695
        %v886 = vpow.pop %v885
        %v887 = vmul.f32 %v800, 1.442695
        %v888 = vpow.pop %v887
        %v889 = vmul.f32 %v801, 1.442695
        %v890 = vpow.pop %v889
        %v891 = vmul.f32 %v802, 1.442695
        %v892 = vpow.pop %v891
        %v893 = vmul.f32 %v803, 1.442695
        %v894 = vpow.pop %v893
        %v895 = vmul.f32 %v804, 1.442695
        %v896 = vpow.pop %v895
        %v897 = vmul.f32 %v805, 1.442695
        %v898 = vpow.pop %v897
        %v899 = vmul.f32 %v806, 1.442695
        %v900 = vpow.pop %v899
        %v901 = vmul.f32 %v807, 1.442695
        %v902 = vpow.pop %v901
        %v903 = vmul.f32 %v808, 1.442695
        %v904 = vpow.pop %v903
        %v905 = vmul.f32 %v809, 1.442695
        %v906 = vpow.pop %v905
        %v907 = vmul.f32 %v810, 1.442695
        %v908 = vpow.pop %v907
        %v909 = vmul.f32 %v811, 1.442695
        %v910 = vpow.pop %v909
        %v911 = vmul.f32 %v812, 1.442695
        %v912 = vpow.pop %v911
        %v913 = vmul.f32 %v813, 1.442695
        %v914 = vpow.pop %v913
        %v915 = vmul.f32 %v814, 1.442695
        %v916 = vpow.pop %v915
        %v917 = vmul.f32 %v815, 1.442695
        %v918 = vpow.pop %v917
        %v919 = vmul.f32 %v816, 1.442695
        %v920 = vpow.pop %v919
        %v921 = vmul.f32 %v817, 1.442695
        %v922 = vpow.pop %v921
        %v923 = vmul.f32 %v818, 1.442695
        %v924 = vpow.pop %v923
        %v925 = vmul.f32 %v819, 1.442695
        %v926 = vpow.pop %v925
        %v927 = vmul.f32 %v820, 1.442695
        %v928 = vpow.pop %v927
        %v929 = vmul.f32 %v821, 1.442695
        %v930 = vpow.pop %v929
        %v931 = vmul.f32 %v822, 1.442695
        %v932 = vpow.pop %v931
        %v933 = vmul.f32 %v823, 1.442695
        %v934 = vpow.pop %v933
        %v935 = vmul.f32 %v824, 1.442695
        %v936 = vpow.pop %v935
        %v937 = vmul.f32 %v825, 1.442695
        %v938 = vpow.pop %v937
        %v939 = vmul.f32 %v826, 1.442695
        %v940 = vpow.pop %v939
        %v941 = vmul.f32 %v827, 1.442695
        %v942 = vpow.pop %v941
        %v943 = vmul.f32 %v828, 1.442695
        %v944 = vpow.pop %v943
        %v945 = vmul.f32 %v829, 1.442695
        %v946 = vpow.pop %v945
        %v947 = vmul.f32 %v830, 1.442695
        %v948 = vpow.pop %v947
        %v949 = vmul.f32 %v831, 1.442695
        %v950 = vpow.pop %v949
        %v951 = vmul.f32 %v832, 1.442695
        %v952 = vpow.pop %v951
        %v953 = vmul.f32 %v833, 1.442695
        %v954 = vpow.pop %v953
        %v955 = vmul.f32 %v834, 1.442695
        %v956 = vpow.pop %v955
        %v957 = vmul.f32 %v835, 1.442695
        %v958 = vpow.pop %v957
        %v959 = vmul.f32 %v836, 1.442695
        %v960 = vpow.pop %v959
        %v961 = vmul.f32 %v837, 1.442695
        %v962 = vpow.pop %v961
        %v963 = vmul.f32 %v838, 1.442695
        %v964 = vpow.pop %v963
        %v965 = vmul.f32 %v839, 1.442695
        %v966 = vpow.pop %v965
        %v967 = vmul.f32 %v840, 1.442695
        %v968 = vpow.pop %v967
        %v969 = vadd.f32 %v842, %v844
        %970 = vadd.xlane.f32.xlu0 %v969
        %v971 = vpop.xlane.xlu0 %970
        %v972 = vadd.f32 %v846, %v848
        %973 = vadd.xlane.f32.xlu0 %v972
        %v974 = vpop.xlane.xlu0 %973
        %v975 = vadd.f32 %v850, %v852
        %976 = vadd.xlane.f32.xlu0 %v975
        %v977 = vpop.xlane.xlu0 %976
        %v978 = vadd.f32 %v854, %v856
        %979 = vadd.xlane.f32.xlu0 %v978
        %v980 = vpop.xlane.xlu0 %979
        %v981 = vadd.f32 %v858, %v860
        %982 = vadd.xlane.f32.xlu0 %v981
        %v983 = vpop.xlane.xlu0 %982
        %v984 = vadd.f32 %v862, %v864
        %985 = vadd.xlane.f32.xlu0 %v984
        %v986 = vpop.xlane.xlu0 %985
        %v987 = vadd.f32 %v866, %v868
        %988 = vadd.xlane.f32.xlu0 %v987
        %v989 = vpop.xlane.xlu0 %988
        %v990 = vadd.f32 %v870, %v872
        %991 = vadd.xlane.f32.xlu0 %v990
        %v992 = vpop.xlane.xlu0 %991
        %v993 = vadd.f32 %v874, %v876
        %994 = vadd.xlane.f32.xlu0 %v993
        %v995 = vpop.xlane.xlu0 %994
        %v996 = vadd.f32 %v878, %v880
        %997 = vadd.xlane.f32.xlu0 %v996
        %v998 = vpop.xlane.xlu0 %997
        %v999 = vadd.f32 %v882, %v884
        %1000 = vadd.xlane.f32.xlu0 %v999
        %v1001 = vpop.xlane.xlu0 %1000
        %v1002 = vadd.f32 %v886, %v888
        %1003 = vadd.xlane.f32.xlu0 %v1002
        %v1004 = vpop.xlane.xlu0 %1003
        %v1005 = vadd.f32 %v890, %v892
        %1006 = vadd.xlane.f32.xlu0 %v1005
        %v1007 = vpop.xlane.xlu0 %1006
        %v1008 = vadd.f32 %v894, %v896
        %1009 = vadd.xlane.f32.xlu0 %v1008
        %v1010 = vpop.xlane.xlu0 %1009
        %v1011 = vadd.f32 %v898, %v900
        %1012 = vadd.xlane.f32.xlu0 %v1011
        %v1013 = vpop.xlane.xlu0 %1012
        %v1014 = vadd.f32 %v902, %v904
        %1015 = vadd.xlane.f32.xlu0 %v1014
        %v1016 = vpop.xlane.xlu0 %1015
        %v1017 = vadd.f32 %v906, %v908
        %1018 = vadd.xlane.f32.xlu0 %v1017
        %v1019 = vpop.xlane.xlu0 %1018
        %v1020 = vadd.f32 %v910, %v912
        %1021 = vadd.xlane.f32.xlu0 %v1020
        %v1022 = vpop.xlane.xlu0 %1021
        %v1023 = vadd.f32 %v914, %v916
        %1024 = vadd.xlane.f32.xlu0 %v1023
        %v1025 = vpop.xlane.xlu0 %1024
        %v1026 = vadd.f32 %v918, %v920
        %1027 = vadd.xlane.f32.xlu0 %v1026
        %v1028 = vpop.xlane.xlu0 %1027
        %v1029 = vadd.f32 %v922, %v924
        %1030 = vadd.xlane.f32.xlu0 %v1029
        %v1031 = vpop.xlane.xlu0 %1030
        %v1032 = vadd.f32 %v926, %v928
        %1033 = vadd.xlane.f32.xlu0 %v1032
        %v1034 = vpop.xlane.xlu0 %1033
        %v1035 = vadd.f32 %v930, %v932
        %1036 = vadd.xlane.f32.xlu0 %v1035
        %v1037 = vpop.xlane.xlu0 %1036
        %v1038 = vadd.f32 %v934, %v936
        %1039 = vadd.xlane.f32.xlu0 %v1038
        %v1040 = vpop.xlane.xlu0 %1039
        %v1041 = vadd.f32 %v938, %v940
        %1042 = vadd.xlane.f32.xlu0 %v1041
        %v1043 = vpop.xlane.xlu0 %1042
        %v1044 = vadd.f32 %v942, %v944
        %1045 = vadd.xlane.f32.xlu0 %v1044
        %v1046 = vpop.xlane.xlu0 %1045
        %v1047 = vadd.f32 %v946, %v948
        %1048 = vadd.xlane.f32.xlu0 %v1047
        %v1049 = vpop.xlane.xlu0 %1048
        %v1050 = vadd.f32 %v950, %v952
        %1051 = vadd.xlane.f32.xlu0 %v1050
        %v1052 = vpop.xlane.xlu0 %1051
        %v1053 = vadd.f32 %v954, %v956
        %1054 = vadd.xlane.f32.xlu0 %v1053
        %v1055 = vpop.xlane.xlu0 %1054
        %v1056 = vadd.f32 %v958, %v960
        %1057 = vadd.xlane.f32.xlu0 %v1056
        %v1058 = vpop.xlane.xlu0 %1057
        %v1059 = vadd.f32 %v962, %v964
        %1060 = vadd.xlane.f32.xlu0 %v1059
        %v1061 = vpop.xlane.xlu0 %1060
        %v1062 = vadd.f32 %v966, %v968
        %1063 = vadd.xlane.f32.xlu0 %v1062
        %v1064 = vpop.xlane.xlu0 %1063
        %v1065 = vrcp.pop %v971
        %v1066 = vmul.f32 %v842, %v1065
        %v1067 = vmul.f32 %v844, %v1065
        %v1068 = vrcp.pop %v974
        %v1069 = vmul.f32 %v846, %v1068
        %v1070 = vmul.f32 %v848, %v1068
        %v1071 = vrcp.pop %v977
        %v1072 = vmul.f32 %v850, %v1071
        %v1073 = vmul.f32 %v852, %v1071
        %v1074 = vrcp.pop %v980
        %v1075 = vmul.f32 %v854, %v1074
        %v1076 = vmul.f32 %v856, %v1074
        %v1077 = vrcp.pop %v983
        %v1078 = vmul.f32 %v858, %v1077
        %v1079 = vmul.f32 %v860, %v1077
        %v1080 = vrcp.pop %v986
        %v1081 = vmul.f32 %v862, %v1080
        %v1082 = vmul.f32 %v864, %v1080
        %v1083 = vrcp.pop %v989
        %v1084 = vmul.f32 %v866, %v1083
        %v1085 = vmul.f32 %v868, %v1083
        %v1086 = vrcp.pop %v992
        %v1087 = vmul.f32 %v870, %v1086
        %v1088 = vmul.f32 %v872, %v1086
        %v1089 = vrcp.pop %v995
        %v1090 = vmul.f32 %v874, %v1089
        %v1091 = vmul.f32 %v876, %v1089
        %v1092 = vrcp.pop %v998
        %v1093 = vmul.f32 %v878, %v1092
        %v1094 = vmul.f32 %v880, %v1092
        %v1095 = vrcp.pop %v1001
        %v1096 = vmul.f32 %v882, %v1095
        %v1097 = vmul.f32 %v884, %v1095
        %v1098 = vrcp.pop %v1004
        %v1099 = vmul.f32 %v886, %v1098
        %v1100 = vmul.f32 %v888, %v1098
        %v1101 = vrcp.pop %v1007
        %v1102 = vmul.f32 %v890, %v1101
        %v1103 = vmul.f32 %v892, %v1101
        %v1104 = vrcp.pop %v1010
        %v1105 = vmul.f32 %v894, %v1104
        %v1106 = vmul.f32 %v896, %v1104
        %v1107 = vrcp.pop %v1013
        %v1108 = vmul.f32 %v898, %v1107
        %v1109 = vmul.f32 %v900, %v1107
        %v1110 = vrcp.pop %v1016
        %v1111 = vmul.f32 %v902, %v1110
        %v1112 = vmul.f32 %v904, %v1110
        %v1113 = vrcp.pop %v1019
        %v1114 = vmul.f32 %v906, %v1113
        %v1115 = vmul.f32 %v908, %v1113
        %v1116 = vrcp.pop %v1022
        %v1117 = vmul.f32 %v910, %v1116
        %v1118 = vmul.f32 %v912, %v1116
        %v1119 = vrcp.pop %v1025
        %v1120 = vmul.f32 %v914, %v1119
        %v1121 = vmul.f32 %v916, %v1119
        %v1122 = vrcp.pop %v1028
        %v1123 = vmul.f32 %v918, %v1122
        %v1124 = vmul.f32 %v920, %v1122
        %v1125 = vrcp.pop %v1031
        %v1126 = vmul.f32 %v922, %v1125
        %v1127 = vmul.f32 %v924, %v1125
        %v1128 = vrcp.pop %v1034
        %v1129 = vmul.f32 %v926, %v1128
        %v1130 = vmul.f32 %v928, %v1128
        %v1131 = vrcp.pop %v1037
        %v1132 = vmul.f32 %v930, %v1131
        %v1133 = vmul.f32 %v932, %v1131
        %v1134 = vrcp.pop %v1040
        %v1135 = vmul.f32 %v934, %v1134
        %v1136 = vmul.f32 %v936, %v1134
        %v1137 = vrcp.pop %v1043
        %v1138 = vmul.f32 %v938, %v1137
        %v1139 = vmul.f32 %v940, %v1137
        %v1140 = vrcp.pop %v1046
        %v1141 = vmul.f32 %v942, %v1140
        %v1142 = vmul.f32 %v944, %v1140
        %v1143 = vrcp.pop %v1049
        %v1144 = vmul.f32 %v946, %v1143
        %v1145 = vmul.f32 %v948, %v1143
        %v1146 = vrcp.pop %v1052
        %v1147 = vmul.f32 %v950, %v1146
        %v1148 = vmul.f32 %v952, %v1146
        %v1149 = vrcp.pop %v1055
        %v1150 = vmul.f32 %v954, %v1149
        %v1151 = vmul.f32 %v956, %v1149
        %v1152 = vrcp.pop %v1058
        %v1153 = vmul.f32 %v958, %v1152
        %v1154 = vmul.f32 %v960, %v1152
        %v1155 = vrcp.pop %v1061
        %v1156 = vmul.f32 %v962, %v1155
        %v1157 = vmul.f32 %v964, %v1155
        %v1158 = vrcp.pop %v1064
        %v1159 = vmul.f32 %v966, %v1158
        %v1160 = vmul.f32 %v968, %v1158
        %1161 = vst [vmem:[%s245] sm:$0xff] %v1066
        %1162 = vst [vmem:[%s245 + $0x8] sm:$0xff] %v1067
        %1163 = vst [vmem:[%s245 + $0x10] sm:$0xff] %v1069
        %1164 = vst [vmem:[%s245 + $0x18] sm:$0xff] %v1070
        %1165 = vst [vmem:[%s245 + $0x20] sm:$0xff] %v1072
        %1166 = vst [vmem:[%s245 + $0x28] sm:$0xff] %v1073
        %1167 = vst [vmem:[%s245 + $0x30] sm:$0xff] %v1075
        %1168 = vst [vmem:[%s245 + $0x38] sm:$0xff] %v1076
        %1169 = vst [vmem:[%s245 + $0x40] sm:$0xff] %v1078
        %1170 = vst [vmem:[%s245 + $0x48] sm:$0xff] %v1079
        %1171 = vst [vmem:[%s245 + $0x50] sm:$0xff] %v1081
        %1172 = vst [vmem:[%s245 + $0x58] sm:$0xff] %v1082
        %1173 = vst [vmem:[%s245 + $0x60] sm:$0xff] %v1084
        %1174 = vst [vmem:[%s245 + $0x68] sm:$0xff] %v1085
        %1175 = vst [vmem:[%s245 + $0x70] sm:$0xff] %v1087
        %1176 = vst [vmem:[%s245 + $0x78] sm:$0xff] %v1088
        %1177 = vst [vmem:[%s245 + $0x80] sm:$0xff] %v1090
        %1178 = vst [vmem:[%s245 + $0x88] sm:$0xff] %v1091
        %1179 = vst [vmem:[%s245 + $0x90] sm:$0xff] %v1093
        %1180 = vst [vmem:[%s245 + $0x98] sm:$0xff] %v1094
        %1181 = vst [vmem:[%s245 + $0xa0] sm:$0xff] %v1096
        %1182 = vst [vmem:[%s245 + $0xa8] sm:$0xff] %v1097
        %1183 = vst [vmem:[%s245 + $0xb0] sm:$0xff] %v1099
        %1184 = vst [vmem:[%s245 + $0xb8] sm:$0xff] %v1100
        %1185 = vst [vmem:[%s245 + $0xc0] sm:$0xff] %v1102
        %1186 = vst [vmem:[%s245 + $0xc8] sm:$0xff] %v1103
        %1187 = vst [vmem:[%s245 + $0xd0] sm:$0xff] %v1105
        %1188 = vst [vmem:[%s245 + $0xd8] sm:$0xff] %v1106
        %1189 = vst [vmem:[%s245 + $0xe0] sm:$0xff] %v1108
        %1190 = vst [vmem:[%s245 + $0xe8] sm:$0xff] %v1109
        %1191 = vst [vmem:[%s245 + $0xf0] sm:$0xff] %v1111
        %1192 = vst [vmem:[%s245 + $0xf8] sm:$0xff] %v1112
        %1193 = vst [vmem:[%s245 + $0x100] sm:$0xff] %v1114
        %1194 = vst [vmem:[%s245 + $0x108] sm:$0xff] %v1115
        %1195 = vst [vmem:[%s245 + $0x110] sm:$0xff] %v1117
        %1196 = vst [vmem:[%s245 + $0x118] sm:$0xff] %v1118
        %1197 = vst [vmem:[%s245 + $0x120] sm:$0xff] %v1120
        %1198 = vst [vmem:[%s245 + $0x128] sm:$0xff] %v1121
        %1199 = vst [vmem:[%s245 + $0x130] sm:$0xff] %v1123
        %1200 = vst [vmem:[%s245 + $0x138] sm:$0xff] %v1124
        %1201 = vst [vmem:[%s245 + $0x140] sm:$0xff] %v1126
        %1202 = vst [vmem:[%s245 + $0x148] sm:$0xff] %v1127
        %1203 = vst [vmem:[%s245 + $0x150] sm:$0xff] %v1129
        %1204 = vst [vmem:[%s245 + $0x158] sm:$0xff] %v1130
        %1205 = vst [vmem:[%s245 + $0x160] sm:$0xff] %v1132
        %1206 = vst [vmem:[%s245 + $0x168] sm:$0xff] %v1133
        %1207 = vst [vmem:[%s245 + $0x170] sm:$0xff] %v1135
        %1208 = vst [vmem:[%s245 + $0x178] sm:$0xff] %v1136
        %1209 = vst [vmem:[%s245 + $0x180] sm:$0xff] %v1138
        %1210 = vst [vmem:[%s245 + $0x188] sm:$0xff] %v1139
        %1211 = vst [vmem:[%s245 + $0x190] sm:$0xff] %v1141
        %1212 = vst [vmem:[%s245 + $0x198] sm:$0xff] %v1142
        %1213 = vst [vmem:[%s245 + $0x1a0] sm:$0xff] %v1144
        %1214 = vst [vmem:[%s245 + $0x1a8] sm:$0xff] %v1145
        %1215 = vst [vmem:[%s245 + $0x1b0] sm:$0xff] %v1147
        %1216 = vst [vmem:[%s245 + $0x1b8] sm:$0xff] %v1148
        %1217 = vst [vmem:[%s245 + $0x1c0] sm:$0xff] %v1150
        %1218 = vst [vmem:[%s245 + $0x1c8] sm:$0xff] %v1151
        %1219 = vst [vmem:[%s245 + $0x1d0] sm:$0xff] %v1153
        %1220 = vst [vmem:[%s245 + $0x1d8] sm:$0xff] %v1154
        %1221 = vst [vmem:[%s245 + $0x1e0] sm:$0xff] %v1156
        %1222 = vst [vmem:[%s245 + $0x1e8] sm:$0xff] %v1157
        %1223 = vst [vmem:[%s245 + $0x1f0] sm:$0xff] %v1159
        %1224 = vst [vmem:[%s245 + $0x1f8] sm:$0xff] %v1160
        %v1225 = vpack.c.bf16 %v1069, %v1066
        %v1226 = vpack.c.bf16 %v1070, %v1067
        %v1227 = vpack.c.bf16 %v1075, %v1072
        %v1228 = vpack.c.bf16 %v1076, %v1073
        %v1229 = vpack.c.bf16 %v1081, %v1078
        %v1230 = vpack.c.bf16 %v1082, %v1079
        %v1231 = vpack.c.bf16 %v1087, %v1084
        %v1232 = vpack.c.bf16 %v1088, %v1085
        %v1233 = vpack.c.bf16 %v1093, %v1090
        %v1234 = vpack.c.bf16 %v1094, %v1091
        %v1235 = vpack.c.bf16 %v1099, %v1096
        %v1236 = vpack.c.bf16 %v1100, %v1097
        %v1237 = vpack.c.bf16 %v1105, %v1102
        %v1238 = vpack.c.bf16 %v1106, %v1103
        %v1239 = vpack.c.bf16 %v1111, %v1108
        %v1240 = vpack.c.bf16 %v1112, %v1109
        %v1241 = vpack.c.bf16 %v1117, %v1114
        %v1242 = vpack.c.bf16 %v1118, %v1115
        %v1243 = vpack.c.bf16 %v1123, %v1120
        %v1244 = vpack.c.bf16 %v1124, %v1121
        %v1245 = vpack.c.bf16 %v1129, %v1126
        %v1246 = vpack.c.bf16 %v1130, %v1127
        %v1247 = vpack.c.bf16 %v1135, %v1132
        %v1248 = vpack.c.bf16 %v1136, %v1133
        %v1249 = vpack.c.bf16 %v1141, %v1138
        %v1250 = vpack.c.bf16 %v1142, %v1139
        %v1251 = vpack.c.bf16 %v1147, %v1144
        %v1252 = vpack.c.bf16 %v1148, %v1145
        %v1253 = vpack.c.bf16 %v1153, %v1150
        %v1254 = vpack.c.bf16 %v1154, %v1151
        %v1255 = vpack.c.bf16 %v1159, %v1156
        %v1256 = vpack.c.bf16 %v1160, %v1157
        %v1258 = vunpack.c.l.b16 %v385
        %v1259 = vunpack.c.h.b16 %v385
        %v1260 = vpack.c.b16 %v1258, %v1258
        %v1261 = vpack.c.b16 %v1259, %v1259
        %1264 = vmatprep.subr.bf16.mxu0 %v1240
        %1265 = vmatpush1.bf16.xpose.msra.mxu0 %v1239
        %1266 = vmatprep.subr.bf16.mxu0 %v1238
        %1267 = vmatpush1.bf16.xpose.msra.mxu0 %v1237
        %1268 = vmatprep.subr.bf16.mxu0 %v1236
        %1269 = vmatpush1.bf16.xpose.msra.mxu0 %v1235
        %1270 = vmatprep.subr.bf16.mxu0 %v1234
        %1271 = vmatpush1.bf16.xpose.msra.mxu0 %v1233
        %1272 = vmatprep.subr.bf16.mxu0 %v1232
        %1273 = vmatpush1.bf16.xpose.msra.mxu0 %v1231
        %1274 = vmatprep.subr.bf16.mxu0 %v1230
        %1275 = vmatpush1.bf16.xpose.msra.mxu0 %v1229
        %1276 = vmatprep.subr.bf16.mxu0 %v1228
        %1277 = vmatpush1.bf16.xpose.msra.mxu0 %v1227
        %1278 = vmatprep.subr.bf16.mxu0 %v1226
        %1279 = vmatpush1.bf16.xpose.msra.mxu0 %v1225
        %1280 = vmatprep.subr.bf16.mxu0 %v1256
        %1281 = vmatpush2.bf16.xpose.msra.mxu0 %v1255
        %1282 = vmatprep.subr.bf16.mxu0 %v1254
        %1283 = vmatpush2.bf16.xpose.msra.mxu0 %v1253
        %1284 = vmatprep.subr.bf16.mxu0 %v1252
        %1285 = vmatpush2.bf16.xpose.msra.mxu0 %v1251
        %1286 = vmatprep.subr.bf16.mxu0 %v1250
        %1287 = vmatpush2.bf16.xpose.msra.mxu0 %v1249
        %1288 = vmatprep.subr.bf16.mxu0 %v1248
        %1289 = vmatpush2.bf16.xpose.msra.mxu0 %v1247
        %1290 = vmatprep.subr.bf16.mxu0 %v1246
        %1291 = vmatpush2.bf16.xpose.msra.mxu0 %v1245
        %1292 = vmatprep.subr.bf16.mxu0 %v1244
        %1293 = vmatpush2.bf16.xpose.msra.mxu0 %v1243
        %1294 = vmatprep.subr.bf16.mxu0 %v1242
        %1295 = vmatpush2.bf16.xpose.msra.mxu0 %v1241
        %1296 = vmatprep.mubr.bf16.mxu0 %v1261
        %1297 = vmatmul.mubr.bf16.gmra.mxu0 %v1260
        %v1298 = vpop.f32.mrf.mxu0
        %v1299 = vadd.f32 0.0, %v1298
        %v1300 = vpop.f32.mrf.mxu0
        %v1301 = vadd.f32 0.0, %v1300
        %v1302 = vpop.f32.mrf.mxu0
        %v1303 = vpop.f32.mrf.mxu0
        %1304 = vdwg.mxu0
        %s1305 = sld [smem:[#allocation3]]
        %v1306 = vstv %s1305
        %v1307 = vmul.f32 %v1306, %v1299
        %v1308 = vmul.f32 %v1306, %v1301
        %s1309 = smul.addr %s379, 4
        %s1310 = scalar_lea.vmem %s250, %s1309
        %v1311 = vld [vmem:[%s1310] sm:$0xff]
        %v1313 = vcombine.high %v1311, %v1311
        %v1315 = vadd.f32 %v1307, %v1311
        %v1316 = vadd.f32 %v1308, %v1313
        %v1319 = vcombine.low %v1315, %v1316
        %1321 = vst [vmem:[%s238] sm:$0xff] %v1319
        %s1322 = sand.u32 %s135, 1
        %s1323 = scalar_lea.sflag [#allocation5], %s1322
        %s1324 = sand.u32 %s135, 1
        %s1325 = smul.addr %s1324, 8
        %s1326 = scalar_lea.vmem [#allocation4], %s1325
        %s1327 = sand.u32 %s163, 1
        %s1328 = scalar_lea.sflag [#allocation7], %s1327
        %s1329 = sand.u32 %s163, 1
        %s1330 = smul.addr %s1329, 512
        %s1331 = scalar_lea.vmem [#allocation6], %s1330
        // Predicated region
        $region41: #{tpu_custom_call.1} parent=35 // pred_check
          %p1332 = pneg %p145
        $region42: #{tpu_custom_call.1} parent=35 // pred_check_branch
          %1334 = sbr.rel (%p1332) target = $region44
        $region43: #{tpu_custom_call.1} parent=35 // pred_region
          %s1335 = smul.u32 2, %s29
          %s1337 = ssub.s32 128, 128
          %1338 = vsyncadd %s1323, %s1337
          %s1339 = smul.addr %s28, 2
          %s1340 = sadd.s32 %s1335, %s1339
          %s1341 = smul.addr %s1340, 64
          %s1342 = scalar_lea.hbm %s4, %s1341
          %s1344 = sshll.u32 %s1326, 4
          %s1345 = int_to_ptr.vmem [resolvable:$true] %s1344
          %1347 = dma.vmem_to_hbm [thread:$0]  %s1345, 128, %s1342, %s1323
        $region44: #{tpu_custom_call.1} parent=35 // pred_fallthru
          _
        // Predicated region
        $region45: #{tpu_custom_call.1} parent=35 // pred_check
          %p1348 = pneg %p173
        $region46: #{tpu_custom_call.1} parent=35 // pred_check_branch
          %1350 = sbr.rel (%p1348) target = $region48
        $region47: #{tpu_custom_call.1} parent=35 // pred_region
          %s1351 = smul.u32 32, %s29
          %s1353 = ssub.s32 8192, 8192
          %1354 = vsyncadd %s1328, %s1353
          %s1355 = smul.addr %s1351, 2
          %s1356 = smul.addr %s28, 64
          %s1357 = sadd.s32 %s1355, %s1356
          %s1358 = smul.addr %s1357, 128
          %s1359 = scalar_lea.hbm %s5, %s1358
          %s1360 = sshll.u32 %s1331, 4
          %s1361 = int_to_ptr.vmem [resolvable:$true] %s1360
          %1366 = dma.vmem_to_hbm [thread:$0]  %s1361, 8192, %s1359, %s1328, 256, 256, 16
        $region48: #{tpu_custom_call.1} parent=35 // pred_fallthru
          _
      $region36: #{tpu_custom_call.1} parent=5 // pred_fallthru
        _
      %p1367 = scmp.le.s32.totalorder 2, %s19
      // Predicated region
      $region49: #{tpu_custom_call.1} parent=5 // pred_check
        %p1368 = pneg %p1367
      $region50: #{tpu_custom_call.1} parent=5 // pred_check_branch
        %1370 = sbr.rel (%p1368) target = $region52
      $region51: #{tpu_custom_call.1} parent=5 // pred_region
        %s1371 = ssub.s32 %s19, 2
        // Predicated region
        $region53: #{tpu_custom_call.1} parent=51 // pred_check
          %p1372 = pneg %p151
        $region54: #{tpu_custom_call.1} parent=51 // pred_check_branch
          %1374 = sbr.rel (%p1372) target = $region56
        $region55: #{tpu_custom_call.1} parent=51 // pred_region
          %s1375 = sand.u32 %s136, 1
          %s1376 = scalar_lea.sflag [#allocation5], %s1375
          %s1377 = sand.u32 %s136, 1
          %s1378 = smul.addr %s1377, 8
          %s1379 = scalar_lea.vmem [#allocation4], %s1378
          %1380 = dma.done %s1376, 128
        $region56: #{tpu_custom_call.1} parent=51 // pred_fallthru
          _
        // Predicated region
        $region57: #{tpu_custom_call.1} parent=51 // pred_check
          %p1381 = pneg %p179
        $region58: #{tpu_custom_call.1} parent=51 // pred_check_branch
          %1383 = sbr.rel (%p1381) target = $region60
        $region59: #{tpu_custom_call.1} parent=51 // pred_region
          %s1384 = sand.u32 %s164, 1
          %s1385 = scalar_lea.sflag [#allocation7], %s1384
          %s1386 = sand.u32 %s164, 1
          %s1387 = smul.addr %s1386, 512
          %s1388 = scalar_lea.vmem [#allocation6], %s1387
          %1389 = dma.done %s1385, 8192
        $region60: #{tpu_custom_call.1} parent=51 // pred_fallthru
          _
      $region52: #{tpu_custom_call.1} parent=5 // pred_fallthru
        _
    $region6: #{tpu_custom_call.1} parent=1 // loop_footer
      %s23 = sadd.s32 1, %s19
    $region7: #{tpu_custom_call.1} parent=1 // loop_footer_branch
      %18 = sbr.rel target = $region3
    $region8: #{tpu_custom_call.1} parent=1 // loop_exit
      _
    %1390 = vsyncpa [#allocation5], 1
    %s1391 = scalar_lea.sflag [#allocation5], 1
    %1392 = vsyncpa %s1391, 1
    %1393 = vsyncpa [#allocation7], 1
    %s1394 = scalar_lea.sflag [#allocation7], 1
    %1395 = vsyncpa %s1394, 1

</llo_original>
